<compile_context>
chip_gen: v6e
topology: v6e:2x2x1
jax: 0.10.0
libtpu: 0.0.40
codegen_flags: <defaults>
</compile_context>

<pallas_src>
import functools

import jax
import jax.numpy as jnp
from jax.experimental import pallas as pl
from jax.experimental.pallas import tpu as pltpu


def _mha_kernel(q_ref, k_ref, v_ref, wq_ref, wk_ref, wv_ref, o_ref, acc_ref,
                *, num_heads):
    bt, S, E = q_ref.shape
    dk = wq_ref.shape[2]
    dv = wv_ref.shape[2]
    op_dt = q_ref.dtype  # MXU operand dtype (bf16 inputs -> bf16 MXU path)

    # Load each distinct input exactly once (self-attention passes the same
    # ref three times).
    xq = q_ref[...].reshape(bt * S, E)
    if k_ref is q_ref:
        xk = xq
    else:
        xk = k_ref[...].reshape(bt * S, E)
    if v_ref is q_ref:
        xv = xq
    elif v_ref is k_ref:
        xv = xk
    else:
        xv = v_ref[...].reshape(bt * S, E)

    for h in range(num_heads):
        # Per-head projections: plain 2-D MXU matmuls against the (E, dk) /
        # (E, dv) weight slabs -- no sub-128 lane slicing of a wide projection.
        # 1/sqrt(dk) is already folded into wq_ref by the wrapper.
        qh = jnp.dot(xq, wq_ref[h], preferred_element_type=jnp.float32)
        kh = jnp.dot(xk, wk_ref[h], preferred_element_type=jnp.float32)
        vh = jnp.dot(xv, wv_ref[h], preferred_element_type=jnp.float32)
        qh = qh.reshape(bt, S, dk).astype(op_dt)
        kh = kh.reshape(bt, S, dk).astype(op_dt)
        vh = vh.reshape(bt, S, dv).astype(op_dt)

        # Attention, batched over the batch tile; softmax stays f32.
        logits = jnp.einsum("bqd,bkd->bqk", qh, kh,
                            preferred_element_type=jnp.float32)  # (bt, S, S)
        logits = logits - jnp.max(logits, axis=-1, keepdims=True)
        p = jnp.exp(logits)
        denom = jnp.sum(p, axis=-1, keepdims=True)
        attn = p * pl.reciprocal(denom, approx=True)  # EUP slot, ~free

        out_h = jnp.einsum("bqk,bkd->bqd", attn.astype(op_dt), vh,
                           preferred_element_type=jnp.float32)   # (bt, S, dv)

        # Head slab lands in the f32 VMEM scratch: bounds live ranges (no
        # lane-axis concat of H narrow pieces) and keeps one final dense store.
        acc_ref[:, :, h * dv:(h + 1) * dv] = out_h

    o_ref[...] = acc_ref[...].astype(o_ref.dtype)


def _mha_self_kernel(x_ref, wq_ref, wk_ref, wv_ref, o_ref, acc_ref, *,
                     num_heads):
    _mha_kernel(x_ref, x_ref, x_ref, wq_ref, wk_ref, wv_ref, o_ref, acc_ref,
                num_heads=num_heads)


def multihead_attention(query, key, value, wq, wk, wv, num_heads, *,
                        compute_dtype=None, block_b=None,
                        vmem_limit_bytes=None):
    """query/key/value: (B, S, E); wq/wk: (kdim, E); wv: (vdim, E) (PyTorch layout)."""
    query = jnp.asarray(query)
    key = jnp.asarray(key)
    value = jnp.asarray(value)
    B, S, E = query.shape
    kdim = wq.shape[0]
    vdim = wv.shape[0]
    assert kdim % num_heads == 0 and vdim % num_heads == 0
    dk = kdim // num_heads
    dv = vdim // num_heads
    scale = 1.0 / (dk ** 0.5)

    self_attn = (query is key) and (key is value)

    # Per-head, pre-transposed weight slabs; scale folded into Wq once here
    # (free wrapper-side constant work) instead of per grid step.
    wq_h = (jnp.asarray(wq).T * scale).reshape(E, num_heads, dk).transpose(1, 0, 2)
    wk_h = jnp.asarray(wk).T.reshape(E, num_heads, dk).transpose(1, 0, 2)
    wv_h = jnp.asarray(wv).T.reshape(E, num_heads, dv).transpose(1, 0, 2)

    if compute_dtype is not None:
        query = query.astype(compute_dtype)
        key = query if self_attn else key.astype(compute_dtype)
        value = query if self_attn else value.astype(compute_dtype)
        wq_h = wq_h.astype(compute_dtype)
        wk_h = wk_h.astype(compute_dtype)
        wv_h = wv_h.astype(compute_dtype)

    itemsize = query.dtype.itemsize
    n_streams = 1 if self_attn else 3

    # Generation-aware VMEM budget (v5e/v6e: 128 MiB, v7x: 64 MiB).
    try:
        vmem_cap = int(pltpu.get_tpu_info().vmem_capacity_bytes)
    except Exception:  # pragma: no cover - conservative fallback (v7x-sized)
        vmem_cap = 64 * 1024 * 1024
    if vmem_limit_bytes is None:
        vmem_limit_bytes = min(int(vmem_cap * 0.9), 100 * 1024 * 1024)
    budget = int(vmem_limit_bytes * 0.8)

    def footprint(bb):
        # Double-buffered streamed inputs/outputs, double-buffered resident
        # weights, f32 scratch, and the f32 per-head working set (qh/kh/vh,
        # logits, probs, head output) with 2x slack for compiler temporaries.
        stream_in = 2 * n_streams * bb * S * E * itemsize
        stream_out = 2 * bb * S * vdim * itemsize
        weights = 2 * (2 * E * kdim + E * vdim) * itemsize
        scratch = bb * S * vdim * 4
        work = 2 * 4 * bb * (2 * S * dk + 2 * S * dv + 2 * S * S)
        return stream_in + stream_out + weights + scratch + work

    if block_b is None:
        # Largest divisor of B that fits the budget, keeping >= 2 grid steps
        # (when B >= 2) so both v7x TensorCores get work.
        min_steps = min(2, B)
        block_b = 1
        for bb in range(B, 0, -1):
            if B % bb:
                continue
            if B // bb < min_steps:
                continue
            if footprint(bb) <= budget:
                block_b = bb
                break
    grid = (B // block_b,)

    qkv_spec = pl.BlockSpec((block_b, S, E), lambda b: (b, 0, 0))
    w_specs = [
        pl.BlockSpec((num_heads, E, dk), lambda b: (0, 0, 0)),  # Wq slabs (resident)
        pl.BlockSpec((num_heads, E, dk), lambda b: (0, 0, 0)),  # Wk slabs
        pl.BlockSpec((num_heads, E, dv), lambda b: (0, 0, 0)),  # Wv slabs
    ]

    if self_attn:
        kernel = functools.partial(_mha_self_kernel, num_heads=num_heads)
        in_specs = [qkv_spec] + w_specs
        args = (query, wq_h, wk_h, wv_h)
    else:
        kernel = functools.partial(_mha_kernel, num_heads=num_heads)
        in_specs = [qkv_spec, qkv_spec, qkv_spec] + w_specs
        args = (query, key, value, wq_h, wk_h, wv_h)

    return pl.pallas_call(
        kernel,
        out_shape=jax.ShapeDtypeStruct((B, S, vdim), query.dtype),
        grid=grid,
        in_specs=in_specs,
        out_specs=pl.BlockSpec((block_b, S, vdim), lambda b: (b, 0, 0)),
        scratch_shapes=[pltpu.VMEM((block_b, S, vdim), jnp.float32)],
        compiler_params=pltpu.CompilerParams(
            dimension_semantics=("parallel",),
            vmem_limit_bytes=int(vmem_limit_bytes)),
    )(*args)


def _xavier_uniform(key, out_features, in_features, dtype=jnp.float32):
    # nn.init.xavier_uniform_ with gain=1 on a (out, in) Linear weight.
    limit = (6.0 / (in_features + out_features)) ** 0.5
    return jax.random.uniform(key, (out_features, in_features), dtype,
                              minval=-limit, maxval=limit)


def _reference(query, key, value, wq, wk, wv, num_heads):
    # Plain-JAX transcription of the PyTorch forward (for verification).
    B, S, _ = query.shape
    kdim, vdim = wq.shape[0], wv.shape[0]
    dk, dv = kdim // num_heads, vdim // num_heads
    q = query @ wq.T
    k = key @ wk.T
    v = value @ wv.T
    q = q.reshape(B, S, num_heads, dk).transpose(0, 2, 1, 3)
    k = k.reshape(B, S, num_heads, dk).transpose(0, 2, 1, 3)
    v = v.reshape(B, S, num_heads, dv).transpose(0, 2, 1, 3)
    logits = jnp.einsum("bhqd,bhkd->bhqk", q, k) / (dk ** 0.5)
    attn = jax.nn.softmax(logits, axis=-1)
    vals = jnp.einsum("bhqk,bhkd->bhqd", attn, v)
    return vals.transpose(0, 2, 1, 3).reshape(B, S, vdim)


if __name__ == "__main__":
    # Small shapes consistent with the module's forward.
    batch, seq, embed_dim = 2, 8, 32
    num_heads = 4
    kdim = vdim = embed_dim

    root = jax.random.PRNGKey(0)
    kq, kk, kv, kx1, kx2, kx3 = jax.random.split(root, 6)

    # Deterministic parameter init (xavier_uniform, bias=False).
    wq = _xavier_uniform(kq, kdim, embed_dim)
    wk = _xavier_uniform(kk, kdim, embed_dim)
    wv = _xavier_uniform(kv, vdim, embed_dim)

    query = jax.random.normal(kx1, (batch, seq, embed_dim), jnp.float32)
    key = jax.random.normal(kx2, (batch, seq, embed_dim), jnp.float32)
    value = jax.random.normal(kx3, (batch, seq, embed_dim), jnp.float32)

    # --- f32 cross-attention path ---
    out = multihead_attention(query, key, value, wq, wk, wv, num_heads)
    out = jax.block_until_ready(out)
    ref = _reference(query, key, value, wq, wk, wv, num_heads)
    assert out.shape == (batch, seq, vdim), out.shape
    # Tolerance covers the EUP approximate reciprocal in the softmax.
    assert jnp.allclose(out, ref, atol=2e-3, rtol=2e-3), \
        float(jnp.max(jnp.abs(out - ref)))

    # --- f32 self-attention path (single streamed input) ---
    out_self = multihead_attention(query, query, query, wq, wk, wv, num_heads)
    out_self = jax.block_until_ready(out_self)
    ref_self = _reference(query, query, query, wq, wk, wv, num_heads)
    assert jnp.allclose(out_self, ref_self, atol=2e-3, rtol=2e-3), \
        float(jnp.max(jnp.abs(out_self - ref_self)))

    # --- bf16 operand path (bf16 MXU; softmax / accumulation stay f32) ---
    out_bf16 = multihead_attention(query, key, value, wq, wk, wv, num_heads,
                                   compute_dtype=jnp.bfloat16)
    out_bf16 = jax.block_until_ready(out_bf16)
    assert float(jnp.max(jnp.abs(out_bf16.astype(jnp.float32) - ref))) < 1e-1

    print("KERNEL_OK")
</pallas_src>

<mosaic_0001>
module attributes {stable_mosaic.version = 11 : i64} {
  func.func @_mha_kernel(%arg0: i32, %arg1: memref<1x8x32xf32, #tpu.memory_space<vmem>>, %arg2: memref<1x8x32xf32, #tpu.memory_space<vmem>>, %arg3: memref<1x8x32xf32, #tpu.memory_space<vmem>>, %arg4: memref<4x32x8xf32, #tpu.memory_space<vmem>>, %arg5: memref<4x32x8xf32, #tpu.memory_space<vmem>>, %arg6: memref<4x32x8xf32, #tpu.memory_space<vmem>>, %arg7: memref<1x8x32xf32, #tpu.memory_space<vmem>>, %arg8: memref<1x8x32xf32, #tpu.memory_space<vmem>>) attributes {dimension_semantics = [#tpu.dimension_semantics<parallel>], iteration_bounds = array<i64: 2>, scalar_prefetch = 0 : i64, scratch_operands = 1 : i64, tpu.core_type = #tpu.core_type<tc>, window_params = [{transform_indices = @transform_0, window_bounds = array<i64: 1, 8, 32>}, {transform_indices = @transform_1, window_bounds = array<i64: 1, 8, 32>}, {transform_indices = @transform_2, window_bounds = array<i64: 1, 8, 32>}, {pipeline_mode = #tpu.pipeline_mode<synchronous>, transform_indices = @transform_3, window_bounds = array<i64: 4, 32, 8>}, {pipeline_mode = #tpu.pipeline_mode<synchronous>, transform_indices = @transform_4, window_bounds = array<i64: 4, 32, 8>}, {pipeline_mode = #tpu.pipeline_mode<synchronous>, transform_indices = @transform_5, window_bounds = array<i64: 4, 32, 8>}, {transform_indices = @transform_6, window_bounds = array<i64: 1, 8, 32>}]} {
    %c0 = arith.constant 0 : index
    %c0_0 = arith.constant 0 : index
    %c0_1 = arith.constant 0 : index
    %0 = vector.load %arg1[%c0, %c0_0, %c0_1] : memref<1x8x32xf32, #tpu.memory_space<vmem>>, vector<1x8x32xf32>
    %1 = vector.shape_cast %0 : vector<1x8x32xf32> to vector<8x32xf32>
    %c0_2 = arith.constant 0 : index
    %c0_3 = arith.constant 0 : index
    %c0_4 = arith.constant 0 : index
    %2 = vector.load %arg2[%c0_2, %c0_3, %c0_4] : memref<1x8x32xf32, #tpu.memory_space<vmem>>, vector<1x8x32xf32>
    %3 = vector.shape_cast %2 : vector<1x8x32xf32> to vector<8x32xf32>
    %c0_5 = arith.constant 0 : index
    %c0_6 = arith.constant 0 : index
    %c0_7 = arith.constant 0 : index
    %4 = vector.load %arg3[%c0_5, %c0_6, %c0_7] : memref<1x8x32xf32, #tpu.memory_space<vmem>>, vector<1x8x32xf32>
    %5 = vector.shape_cast %4 : vector<1x8x32xf32> to vector<8x32xf32>
    %c0_8 = arith.constant 0 : index
    %c0_9 = arith.constant 0 : index
    %c0_10 = arith.constant 0 : index
    %6 = vector.load %arg4[%c0_8, %c0_9, %c0_10] : memref<4x32x8xf32, #tpu.memory_space<vmem>>, vector<1x32x8xf32>
    %7 = vector.shape_cast %6 : vector<1x32x8xf32> to vector<32x8xf32>
    %cst = arith.constant dense<0.000000e+00> : vector<8x8xf32>
    %8 = tpu.matmul %1, %7, %cst {dimension_numbers = #tpu.dot_dimension_numbers<[1], [0], [0], [1], [0, 0, 1, 1], [], []>} : vector<8x32xf32>, vector<32x8xf32>, vector<8x8xf32> -> vector<8x8xf32>
    %c0_11 = arith.constant 0 : index
    %c0_12 = arith.constant 0 : index
    %c0_13 = arith.constant 0 : index
    %9 = vector.load %arg5[%c0_11, %c0_12, %c0_13] : memref<4x32x8xf32, #tpu.memory_space<vmem>>, vector<1x32x8xf32>
    %10 = vector.shape_cast %9 : vector<1x32x8xf32> to vector<32x8xf32>
    %cst_14 = arith.constant dense<0.000000e+00> : vector<8x8xf32>
    %11 = tpu.matmul %3, %10, %cst_14 {dimension_numbers = #tpu.dot_dimension_numbers<[1], [0], [0], [1], [0, 0, 1, 1], [], []>} : vector<8x32xf32>, vector<32x8xf32>, vector<8x8xf32> -> vector<8x8xf32>
    %c0_15 = arith.constant 0 : index
    %c0_16 = arith.constant 0 : index
    %c0_17 = arith.constant 0 : index
    %12 = vector.load %arg6[%c0_15, %c0_16, %c0_17] : memref<4x32x8xf32, #tpu.memory_space<vmem>>, vector<1x32x8xf32>
    %13 = vector.shape_cast %12 : vector<1x32x8xf32> to vector<32x8xf32>
    %cst_18 = arith.constant dense<0.000000e+00> : vector<8x8xf32>
    %14 = tpu.matmul %5, %13, %cst_18 {dimension_numbers = #tpu.dot_dimension_numbers<[1], [0], [0], [1], [0, 0, 1, 1], [], []>} : vector<8x32xf32>, vector<32x8xf32>, vector<8x8xf32> -> vector<8x8xf32>
    %15 = vector.shape_cast %8 : vector<8x8xf32> to vector<1x8x8xf32>
    %16 = vector.shape_cast %11 : vector<8x8xf32> to vector<1x8x8xf32>
    %17 = vector.shape_cast %14 : vector<8x8xf32> to vector<1x8x8xf32>
    "tpu.trace_start"() <{level = 10 : i32, message = "bqd,bkd->bqk"}> : () -> ()
    %cst_19 = arith.constant dense<0.000000e+00> : vector<1x8x8xf32>
    %18 = tpu.matmul %15, %16, %cst_19 {dimension_numbers = #tpu.dot_dimension_numbers<[2], [2], [1], [1], [0, 0, 0, 1, 1, 1], [0], [0]>} : vector<1x8x8xf32>, vector<1x8x8xf32>, vector<1x8x8xf32> -> vector<1x8x8xf32>
    "tpu.trace_stop"() : () -> ()
    %cst_20 = arith.constant dense<0xFF800000> : vector<1x8xf32>
    %19 = vector.multi_reduction <maximumf>, %18, %cst_20 [2] : vector<1x8x8xf32> to vector<1x8xf32>
    %20 = vector.shape_cast %19 : vector<1x8xf32> to vector<1x8x1xf32>
    %21 = vector.broadcast %20 : vector<1x8x1xf32> to vector<1x8x8xf32>
    %22 = arith.subf %18, %21 : vector<1x8x8xf32>
    %23 = math.exp %22 : vector<1x8x8xf32>
    %cst_21 = arith.constant dense<0.000000e+00> : vector<1x8xf32>
    %24 = vector.multi_reduction <add>, %23, %cst_21 [2] : vector<1x8x8xf32> to vector<1x8xf32>
    %25 = vector.shape_cast %24 : vector<1x8xf32> to vector<1x8x1xf32>
    %26 = tpu.reciprocal %25 {approx = true} : vector<1x8x1xf32> -> vector<1x8x1xf32>
    %27 = vector.broadcast %26 : vector<1x8x1xf32> to vector<1x8x8xf32>
    %28 = arith.mulf %23, %27 : vector<1x8x8xf32>
    "tpu.trace_start"() <{level = 10 : i32, message = "bqk,bkd->bqd"}> : () -> ()
    %cst_22 = arith.constant dense<0.000000e+00> : vector<1x8x8xf32>
    %29 = tpu.matmul %28, %17, %cst_22 {dimension_numbers = #tpu.dot_dimension_numbers<[2], [1], [1], [2], [0, 0, 0, 1, 1, 2], [0], [0]>} : vector<1x8x8xf32>, vector<1x8x8xf32>, vector<1x8x8xf32> -> vector<1x8x8xf32>
    "tpu.trace_stop"() : () -> ()
    %c0_23 = arith.constant 0 : index
    %c0_24 = arith.constant 0 : index
    %c0_25 = arith.constant 0 : index
    %30 = vector.load %arg8[%c0_23, %c0_24, %c0_25] : memref<1x8x32xf32, #tpu.memory_space<vmem>>, vector<1x8x8xf32>
    tpu.vector_store %arg8[%c0_23, %c0_24, %c0_25], %29 {strides = array<i32>} : memref<1x8x32xf32, #tpu.memory_space<vmem>>, vector<1x8x8xf32>,
    %c1 = arith.constant 1 : index
    %c0_26 = arith.constant 0 : index
    %c0_27 = arith.constant 0 : index
    %31 = vector.load %arg4[%c1, %c0_26, %c0_27] : memref<4x32x8xf32, #tpu.memory_space<vmem>>, vector<1x32x8xf32>
    %32 = vector.shape_cast %31 : vector<1x32x8xf32> to vector<32x8xf32>
    %cst_28 = arith.constant dense<0.000000e+00> : vector<8x8xf32>
    %33 = tpu.matmul %1, %32, %cst_28 {dimension_numbers = #tpu.dot_dimension_numbers<[1], [0], [0], [1], [0, 0, 1, 1], [], []>} : vector<8x32xf32>, vector<32x8xf32>, vector<8x8xf32> -> vector<8x8xf32>
    %c1_29 = arith.constant 1 : index
    %c0_30 = arith.constant 0 : index
    %c0_31 = arith.constant 0 : index
    %34 = vector.load %arg5[%c1_29, %c0_30, %c0_31] : memref<4x32x8xf32, #tpu.memory_space<vmem>>, vector<1x32x8xf32>
    %35 = vector.shape_cast %34 : vector<1x32x8xf32> to vector<32x8xf32>
    %cst_32 = arith.constant dense<0.000000e+00> : vector<8x8xf32>
    %36 = tpu.matmul %3, %35, %cst_32 {dimension_numbers = #tpu.dot_dimension_numbers<[1], [0], [0], [1], [0, 0, 1, 1], [], []>} : vector<8x32xf32>, vector<32x8xf32>, vector<8x8xf32> -> vector<8x8xf32>
    %c1_33 = arith.constant 1 : index
    %c0_34 = arith.constant 0 : index
    %c0_35 = arith.constant 0 : index
    %37 = vector.load %arg6[%c1_33, %c0_34, %c0_35] : memref<4x32x8xf32, #tpu.memory_space<vmem>>, vector<1x32x8xf32>
    %38 = vector.shape_cast %37 : vector<1x32x8xf32> to vector<32x8xf32>
    %cst_36 = arith.constant dense<0.000000e+00> : vector<8x8xf32>
    %39 = tpu.matmul %5, %38, %cst_36 {dimension_numbers = #tpu.dot_dimension_numbers<[1], [0], [0], [1], [0, 0, 1, 1], [], []>} : vector<8x32xf32>, vector<32x8xf32>, vector<8x8xf32> -> vector<8x8xf32>
    %40 = vector.shape_cast %33 : vector<8x8xf32> to vector<1x8x8xf32>
    %41 = vector.shape_cast %36 : vector<8x8xf32> to vector<1x8x8xf32>
    %42 = vector.shape_cast %39 : vector<8x8xf32> to vector<1x8x8xf32>
    "tpu.trace_start"() <{level = 10 : i32, message = "bqd,bkd->bqk"}> : () -> ()
    %cst_37 = arith.constant dense<0.000000e+00> : vector<1x8x8xf32>
    %43 = tpu.matmul %40, %41, %cst_37 {dimension_numbers = #tpu.dot_dimension_numbers<[2], [2], [1], [1], [0, 0, 0, 1, 1, 1], [0], [0]>} : vector<1x8x8xf32>, vector<1x8x8xf32>, vector<1x8x8xf32> -> vector<1x8x8xf32>
    "tpu.trace_stop"() : () -> ()
    %cst_38 = arith.constant dense<0xFF800000> : vector<1x8xf32>
    %44 = vector.multi_reduction <maximumf>, %43, %cst_38 [2] : vector<1x8x8xf32> to vector<1x8xf32>
    %45 = vector.shape_cast %44 : vector<1x8xf32> to vector<1x8x1xf32>
    %46 = vector.broadcast %45 : vector<1x8x1xf32> to vector<1x8x8xf32>
    %47 = arith.subf %43, %46 : vector<1x8x8xf32>
    %48 = math.exp %47 : vector<1x8x8xf32>
    %cst_39 = arith.constant dense<0.000000e+00> : vector<1x8xf32>
    %49 = vector.multi_reduction <add>, %48, %cst_39 [2] : vector<1x8x8xf32> to vector<1x8xf32>
    %50 = vector.shape_cast %49 : vector<1x8xf32> to vector<1x8x1xf32>
    %51 = tpu.reciprocal %50 {approx = true} : vector<1x8x1xf32> -> vector<1x8x1xf32>
    %52 = vector.broadcast %51 : vector<1x8x1xf32> to vector<1x8x8xf32>
    %53 = arith.mulf %48, %52 : vector<1x8x8xf32>
    "tpu.trace_start"() <{level = 10 : i32, message = "bqk,bkd->bqd"}> : () -> ()
    %cst_40 = arith.constant dense<0.000000e+00> : vector<1x8x8xf32>
    %54 = tpu.matmul %53, %42, %cst_40 {dimension_numbers = #tpu.dot_dimension_numbers<[2], [1], [1], [2], [0, 0, 0, 1, 1, 2], [0], [0]>} : vector<1x8x8xf32>, vector<1x8x8xf32>, vector<1x8x8xf32> -> vector<1x8x8xf32>
    "tpu.trace_stop"() : () -> ()
    %c0_41 = arith.constant 0 : index
    %c0_42 = arith.constant 0 : index
    %c8 = arith.constant 8 : index
    %55 = vector.load %arg8[%c0_41, %c0_42, %c8] : memref<1x8x32xf32, #tpu.memory_space<vmem>>, vector<1x8x8xf32>
    tpu.vector_store %arg8[%c0_41, %c0_42, %c8], %54 {strides = array<i32>} : memref<1x8x32xf32, #tpu.memory_space<vmem>>, vector<1x8x8xf32>,
    %c2 = arith.constant 2 : index
    %c0_43 = arith.constant 0 : index
    %c0_44 = arith.constant 0 : index
    %56 = vector.load %arg4[%c2, %c0_43, %c0_44] : memref<4x32x8xf32, #tpu.memory_space<vmem>>, vector<1x32x8xf32>
    %57 = vector.shape_cast %56 : vector<1x32x8xf32> to vector<32x8xf32>
    %cst_45 = arith.constant dense<0.000000e+00> : vector<8x8xf32>
    %58 = tpu.matmul %1, %57, %cst_45 {dimension_numbers = #tpu.dot_dimension_numbers<[1], [0], [0], [1], [0, 0, 1, 1], [], []>} : vector<8x32xf32>, vector<32x8xf32>, vector<8x8xf32> -> vector<8x8xf32>
    %c2_46 = arith.constant 2 : index
    %c0_47 = arith.constant 0 : index
    %c0_48 = arith.constant 0 : index
    %59 = vector.load %arg5[%c2_46, %c0_47, %c0_48] : memref<4x32x8xf32, #tpu.memory_space<vmem>>, vector<1x32x8xf32>
    %60 = vector.shape_cast %59 : vector<1x32x8xf32> to vector<32x8xf32>
    %cst_49 = arith.constant dense<0.000000e+00> : vector<8x8xf32>
    %61 = tpu.matmul %3, %60, %cst_49 {dimension_numbers = #tpu.dot_dimension_numbers<[1], [0], [0], [1], [0, 0, 1, 1], [], []>} : vector<8x32xf32>, vector<32x8xf32>, vector<8x8xf32> -> vector<8x8xf32>
    %c2_50 = arith.constant 2 : index
    %c0_51 = arith.constant 0 : index
    %c0_52 = arith.constant 0 : index
    %62 = vector.load %arg6[%c2_50, %c0_51, %c0_52] : memref<4x32x8xf32, #tpu.memory_space<vmem>>, vector<1x32x8xf32>
    %63 = vector.shape_cast %62 : vector<1x32x8xf32> to vector<32x8xf32>
    %cst_53 = arith.constant dense<0.000000e+00> : vector<8x8xf32>
    %64 = tpu.matmul %5, %63, %cst_53 {dimension_numbers = #tpu.dot_dimension_numbers<[1], [0], [0], [1], [0, 0, 1, 1], [], []>} : vector<8x32xf32>, vector<32x8xf32>, vector<8x8xf32> -> vector<8x8xf32>
    %65 = vector.shape_cast %58 : vector<8x8xf32> to vector<1x8x8xf32>
    %66 = vector.shape_cast %61 : vector<8x8xf32> to vector<1x8x8xf32>
    %67 = vector.shape_cast %64 : vector<8x8xf32> to vector<1x8x8xf32>
    "tpu.trace_start"() <{level = 10 : i32, message = "bqd,bkd->bqk"}> : () -> ()
    %cst_54 = arith.constant dense<0.000000e+00> : vector<1x8x8xf32>
    %68 = tpu.matmul %65, %66, %cst_54 {dimension_numbers = #tpu.dot_dimension_numbers<[2], [2], [1], [1], [0, 0, 0, 1, 1, 1], [0], [0]>} : vector<1x8x8xf32>, vector<1x8x8xf32>, vector<1x8x8xf32> -> vector<1x8x8xf32>
    "tpu.trace_stop"() : () -> ()
    %cst_55 = arith.constant dense<0xFF800000> : vector<1x8xf32>
    %69 = vector.multi_reduction <maximumf>, %68, %cst_55 [2] : vector<1x8x8xf32> to vector<1x8xf32>
    %70 = vector.shape_cast %69 : vector<1x8xf32> to vector<1x8x1xf32>
    %71 = vector.broadcast %70 : vector<1x8x1xf32> to vector<1x8x8xf32>
    %72 = arith.subf %68, %71 : vector<1x8x8xf32>
    %73 = math.exp %72 : vector<1x8x8xf32>
    %cst_56 = arith.constant dense<0.000000e+00> : vector<1x8xf32>
    %74 = vector.multi_reduction <add>, %73, %cst_56 [2] : vector<1x8x8xf32> to vector<1x8xf32>
    %75 = vector.shape_cast %74 : vector<1x8xf32> to vector<1x8x1xf32>
    %76 = tpu.reciprocal %75 {approx = true} : vector<1x8x1xf32> -> vector<1x8x1xf32>
    %77 = vector.broadcast %76 : vector<1x8x1xf32> to vector<1x8x8xf32>
    %78 = arith.mulf %73, %77 : vector<1x8x8xf32>
    "tpu.trace_start"() <{level = 10 : i32, message = "bqk,bkd->bqd"}> : () -> ()
    %cst_57 = arith.constant dense<0.000000e+00> : vector<1x8x8xf32>
    %79 = tpu.matmul %78, %67, %cst_57 {dimension_numbers = #tpu.dot_dimension_numbers<[2], [1], [1], [2], [0, 0, 0, 1, 1, 2], [0], [0]>} : vector<1x8x8xf32>, vector<1x8x8xf32>, vector<1x8x8xf32> -> vector<1x8x8xf32>
    "tpu.trace_stop"() : () -> ()
    %c0_58 = arith.constant 0 : index
    %c0_59 = arith.constant 0 : index
    %c16 = arith.constant 16 : index
    %80 = vector.load %arg8[%c0_58, %c0_59, %c16] : memref<1x8x32xf32, #tpu.memory_space<vmem>>, vector<1x8x8xf32>
    tpu.vector_store %arg8[%c0_58, %c0_59, %c16], %79 {strides = array<i32>} : memref<1x8x32xf32, #tpu.memory_space<vmem>>, vector<1x8x8xf32>,
    %c3 = arith.constant 3 : index
    %c0_60 = arith.constant 0 : index
    %c0_61 = arith.constant 0 : index
    %81 = vector.load %arg4[%c3, %c0_60, %c0_61] : memref<4x32x8xf32, #tpu.memory_space<vmem>>, vector<1x32x8xf32>
    %82 = vector.shape_cast %81 : vector<1x32x8xf32> to vector<32x8xf32>
    %cst_62 = arith.constant dense<0.000000e+00> : vector<8x8xf32>
    %83 = tpu.matmul %1, %82, %cst_62 {dimension_numbers = #tpu.dot_dimension_numbers<[1], [0], [0], [1], [0, 0, 1, 1], [], []>} : vector<8x32xf32>, vector<32x8xf32>, vector<8x8xf32> -> vector<8x8xf32>
    %c3_63 = arith.constant 3 : index
    %c0_64 = arith.constant 0 : index
    %c0_65 = arith.constant 0 : index
    %84 = vector.load %arg5[%c3_63, %c0_64, %c0_65] : memref<4x32x8xf32, #tpu.memory_space<vmem>>, vector<1x32x8xf32>
    %85 = vector.shape_cast %84 : vector<1x32x8xf32> to vector<32x8xf32>
    %cst_66 = arith.constant dense<0.000000e+00> : vector<8x8xf32>
    %86 = tpu.matmul %3, %85, %cst_66 {dimension_numbers = #tpu.dot_dimension_numbers<[1], [0], [0], [1], [0, 0, 1, 1], [], []>} : vector<8x32xf32>, vector<32x8xf32>, vector<8x8xf32> -> vector<8x8xf32>
    %c3_67 = arith.constant 3 : index
    %c0_68 = arith.constant 0 : index
    %c0_69 = arith.constant 0 : index
    %87 = vector.load %arg6[%c3_67, %c0_68, %c0_69] : memref<4x32x8xf32, #tpu.memory_space<vmem>>, vector<1x32x8xf32>
    %88 = vector.shape_cast %87 : vector<1x32x8xf32> to vector<32x8xf32>
    %cst_70 = arith.constant dense<0.000000e+00> : vector<8x8xf32>
    %89 = tpu.matmul %5, %88, %cst_70 {dimension_numbers = #tpu.dot_dimension_numbers<[1], [0], [0], [1], [0, 0, 1, 1], [], []>} : vector<8x32xf32>, vector<32x8xf32>, vector<8x8xf32> -> vector<8x8xf32>
    %90 = vector.shape_cast %83 : vector<8x8xf32> to vector<1x8x8xf32>
    %91 = vector.shape_cast %86 : vector<8x8xf32> to vector<1x8x8xf32>
    %92 = vector.shape_cast %89 : vector<8x8xf32> to vector<1x8x8xf32>
    "tpu.trace_start"() <{level = 10 : i32, message = "bqd,bkd->bqk"}> : () -> ()
    %cst_71 = arith.constant dense<0.000000e+00> : vector<1x8x8xf32>
    %93 = tpu.matmul %90, %91, %cst_71 {dimension_numbers = #tpu.dot_dimension_numbers<[2], [2], [1], [1], [0, 0, 0, 1, 1, 1], [0], [0]>} : vector<1x8x8xf32>, vector<1x8x8xf32>, vector<1x8x8xf32> -> vector<1x8x8xf32>
    "tpu.trace_stop"() : () -> ()
    %cst_72 = arith.constant dense<0xFF800000> : vector<1x8xf32>
    %94 = vector.multi_reduction <maximumf>, %93, %cst_72 [2] : vector<1x8x8xf32> to vector<1x8xf32>
    %95 = vector.shape_cast %94 : vector<1x8xf32> to vector<1x8x1xf32>
    %96 = vector.broadcast %95 : vector<1x8x1xf32> to vector<1x8x8xf32>
    %97 = arith.subf %93, %96 : vector<1x8x8xf32>
    %98 = math.exp %97 : vector<1x8x8xf32>
    %cst_73 = arith.constant dense<0.000000e+00> : vector<1x8xf32>
    %99 = vector.multi_reduction <add>, %98, %cst_73 [2] : vector<1x8x8xf32> to vector<1x8xf32>
    %100 = vector.shape_cast %99 : vector<1x8xf32> to vector<1x8x1xf32>
    %101 = tpu.reciprocal %100 {approx = true} : vector<1x8x1xf32> -> vector<1x8x1xf32>
    %102 = vector.broadcast %101 : vector<1x8x1xf32> to vector<1x8x8xf32>
    %103 = arith.mulf %98, %102 : vector<1x8x8xf32>
    "tpu.trace_start"() <{level = 10 : i32, message = "bqk,bkd->bqd"}> : () -> ()
    %cst_74 = arith.constant dense<0.000000e+00> : vector<1x8x8xf32>
    %104 = tpu.matmul %103, %92, %cst_74 {dimension_numbers = #tpu.dot_dimension_numbers<[2], [1], [1], [2], [0, 0, 0, 1, 1, 2], [0], [0]>} : vector<1x8x8xf32>, vector<1x8x8xf32>, vector<1x8x8xf32> -> vector<1x8x8xf32>
    "tpu.trace_stop"() : () -> ()
    %c0_75 = arith.constant 0 : index
    %c0_76 = arith.constant 0 : index
    %c24 = arith.constant 24 : index
    %105 = vector.load %arg8[%c0_75, %c0_76, %c24] : memref<1x8x32xf32, #tpu.memory_space<vmem>>, vector<1x8x8xf32>
    tpu.vector_store %arg8[%c0_75, %c0_76, %c24], %104 {strides = array<i32>} : memref<1x8x32xf32, #tpu.memory_space<vmem>>, vector<1x8x8xf32>,
    %c0_77 = arith.constant 0 : index
    %c0_78 = arith.constant 0 : index
    %c0_79 = arith.constant 0 : index
    %106 = vector.load %arg8[%c0_77, %c0_78, %c0_79] : memref<1x8x32xf32, #tpu.memory_space<vmem>>, vector<1x8x32xf32>
    %c0_80 = arith.constant 0 : index
    %c0_81 = arith.constant 0 : index
    %c0_82 = arith.constant 0 : index
    %107 = vector.load %arg7[%c0_80, %c0_81, %c0_82] : memref<1x8x32xf32, #tpu.memory_space<vmem>>, vector<1x8x32xf32>
    tpu.vector_store %arg7[%c0_80, %c0_81, %c0_82], %106 {strides = array<i32>} : memref<1x8x32xf32, #tpu.memory_space<vmem>>, vector<1x8x32xf32>,
    return
  }
  func.func @transform_0(%arg0: i32) -> (i32, i32, i32) {
    %c0_i32 = arith.constant 0 : i32
    %c0_i32_0 = arith.constant 0 : i32
    %c0_i32_1 = arith.constant 0 : i32
    return %arg0, %c0_i32, %c0_i32_0 : i32, i32, i32
  }
  func.func @transform_1(%arg0: i32) -> (i32, i32, i32) {
    %c0_i32 = arith.constant 0 : i32
    %c0_i32_0 = arith.constant 0 : i32
    %c0_i32_1 = arith.constant 0 : i32
    return %arg0, %c0_i32, %c0_i32_0 : i32, i32, i32
  }
  func.func @transform_2(%arg0: i32) -> (i32, i32, i32) {
    %c0_i32 = arith.constant 0 : i32
    %c0_i32_0 = arith.constant 0 : i32
    %c0_i32_1 = arith.constant 0 : i32
    return %arg0, %c0_i32, %c0_i32_0 : i32, i32, i32
  }
  func.func @transform_3(%arg0: i32) -> (i32, i32, i32) {
    %c0_i32 = arith.constant 0 : i32
    %c0_i32_0 = arith.constant 0 : i32
    %c0_i32_1 = arith.constant 0 : i32
    %c0_i32_2 = arith.constant 0 : i32
    return %c0_i32, %c0_i32_0, %c0_i32_1 : i32, i32, i32
  }
  func.func @transform_4(%arg0: i32) -> (i32, i32, i32) {
    %c0_i32 = arith.constant 0 : i32
    %c0_i32_0 = arith.constant 0 : i32
    %c0_i32_1 = arith.constant 0 : i32
    %c0_i32_2 = arith.constant 0 : i32
    return %c0_i32, %c0_i32_0, %c0_i32_1 : i32, i32, i32
  }
  func.func @transform_5(%arg0: i32) -> (i32, i32, i32) {
    %c0_i32 = arith.constant 0 : i32
    %c0_i32_0 = arith.constant 0 : i32
    %c0_i32_1 = arith.constant 0 : i32
    %c0_i32_2 = arith.constant 0 : i32
    return %c0_i32, %c0_i32_0, %c0_i32_1 : i32, i32, i32
  }
  func.func @transform_6(%arg0: i32) -> (i32, i32, i32) {
    %c0_i32 = arith.constant 0 : i32
    %c0_i32_0 = arith.constant 0 : i32
    %c0_i32_1 = arith.constant 0 : i32
    return %arg0, %c0_i32, %c0_i32_0 : i32, i32, i32
  }
}

</mosaic_0001>

<llo_original>
// kernel: tpu_custom_call.1
$region0: #{tpu_custom_call.1}
  #allocation0 [shape = 'u32[]', space=smem, size = 0x4, offset = 0x4, fixed_abs, tag = 'smem constant byte address 0x4 - core index']
  #allocation1 [shape = 'u32[144,128]{1,0:T(1,128)}', space=vmem, size = 0x12000, scoped, tag = 'internal scratch']
  #allocation2 [shape = 'f32[1,8,32]{2,1,0:T(8,128)}', space=vmem, size = 0x1000, scoped, tag = 'scratch operand']
  %s0 = inlined_call_operand.vmem [shape: f32[2,8,32], index: 0, kind: input, shape index: {}]
  %s1 = inlined_call_operand.vmem [shape: f32[2,8,32], index: 1, kind: input, shape index: {}]
  %s2 = inlined_call_operand.vmem [shape: f32[2,8,32], index: 2, kind: input, shape index: {}]
  %s3 = inlined_call_operand.vmem [shape: f32[4,32,8], index: 3, kind: input, shape index: {}]
  %s4 = inlined_call_operand.vmem [shape: f32[4,32,8], index: 4, kind: input, shape index: {}]
  %s5 = inlined_call_operand.vmem [shape: f32[4,32,8], index: 5, kind: input, shape index: {}]
  %s6 = inlined_call_operand.hbm [shape: f32[2,8,32], index: 6, kind: output, shape index: {}]
  %s7 = sld [smem:[#allocation0]]
  $region57: #{tpu_custom_call.1} parent=0
    _
  %s9 = ssub.s32 1, %s7
  %s10 = scalar_select 0, %s9, %s7
  $region1: #{tpu_custom_call.1} parent=0
    #allocation3 [shape = 'u8[8192]{0}', space=vmem, size = 0x2000, scoped, tag = 'output window, operand 0']
    #allocation4 [shape = 's32[2]{0}', space=sflag, size = 0x8, scoped, tag = 'scoped memory for tpu_custom_call.1']
    %11 = vsyncpa [#allocation4], 0
    %s12 = scalar_lea.sflag [#allocation4], 1
    %13 = vsyncpa %s12, 0
    loop: start=0, step=1, limit=4
    $region2: #{tpu_custom_call.1} parent=1 // loop_pre_header
      _
    $region3: #{tpu_custom_call.1} parent=1 // loop_header
      %s15 = sphi 0, %s19
      %p16 = scmp.ge.s32.totalorder %s15, 4
      %s25 = sphi 0, %s27
      %s28 = sphi 0, %s25
      %s29 = sphi 0, %s28
      %s45 = sphi 0, %s29
      %s51 = sphi 0, %s53
      %s54 = sphi 0, %s51
      %s55 = sphi 0, %s54
      %s71 = sphi 0, %s55
      %s77 = sphi 0, %s79
      %s80 = sphi 0, %s77
      %s81 = sphi 0, %s80
      %s97 = sphi 0, %s81
      %s101 = sphi 0, %s101
      %s103 = sphi 0, %s101
      %s104 = sphi 0, %s103
      %s118 = sphi 0, %s104
      %s122 = sphi 0, %s122
      %s124 = sphi 0, %s122
      %s125 = sphi 0, %s124
      %s139 = sphi 0, %s125
      %s143 = sphi 0, %s143
      %s145 = sphi 0, %s143
      %s146 = sphi 0, %s145
      %s160 = sphi 0, %s146
      %s166 = sphi 0, %s168
      %s169 = sphi 0, %s166
      %s170 = sphi 0, %s169
      %s186 = sphi 0, %s170
    $region4: #{tpu_custom_call.1} parent=1 // loop_header_branch
      %18 = sbr.rel (%p16) target = $region8
    $region5: #{tpu_custom_call.1} parent=1 // loop_body
      %s20 = ssub.s32 %s15, 1
      %s21 = ssub.s32 %s15, 2
      %s22 = sadd.s32 %s15, 1
      %s23 = ssub.s32 %s15, %s22
      %p24 = scmp.eq.s32.totalorder %s23, 0
      %s26 = sadd.s32 %s25, 1
      %s27 = scalar_select %p24, %s25, %s26
      %p30 = pneg %p24
      %p31 = scmp.eq.s32.totalorder %s15, 1
      %p32 = por %p30, %p31
      %p33 = scmp.ne.s32.totalorder %s25, %s28
      %p34 = scmp.eq.s32.totalorder %s15, 0
      %p35 = por %p33, %p34
      %p36 = scmp.ne.s32.totalorder %s25, %s28
      %p37 = scmp.eq.s32.totalorder %s20, 1
      %p38 = por %p36, %p37
      %p39 = scmp.ne.s32.totalorder %s28, %s29
      %p40 = scmp.eq.s32.totalorder %s20, 0
      %p41 = por %p39, %p40
      %p42 = scmp.ne.s32.totalorder %s28, %s29
      %p43 = scmp.eq.s32.totalorder %s21, 1
      %p44 = por %p42, %p43
      %p46 = scmp.ne.s32.totalorder %s29, %s45
      %p47 = scmp.eq.s32.totalorder %s21, 0
      %p48 = por %p46, %p47
      %s49 = ssub.s32 %s15, %s22
      %p50 = scmp.eq.s32.totalorder %s49, 0
      %s52 = sadd.s32 %s51, 1
      %s53 = scalar_select %p50, %s51, %s52
      %p56 = pneg %p50
      %p57 = scmp.eq.s32.totalorder %s15, 1
      %p58 = por %p56, %p57
      %p59 = scmp.ne.s32.totalorder %s51, %s54
      %p60 = scmp.eq.s32.totalorder %s15, 0
      %p61 = por %p59, %p60
      %p62 = scmp.ne.s32.totalorder %s51, %s54
      %p63 = scmp.eq.s32.totalorder %s20, 1
      %p64 = por %p62, %p63
      %p65 = scmp.ne.s32.totalorder %s54, %s55
      %p66 = scmp.eq.s32.totalorder %s20, 0
      %p67 = por %p65, %p66
      %p68 = scmp.ne.s32.totalorder %s54, %s55
      %p69 = scmp.eq.s32.totalorder %s21, 1
      %p70 = por %p68, %p69
      %p72 = scmp.ne.s32.totalorder %s55, %s71
      %p73 = scmp.eq.s32.totalorder %s21, 0
      %p74 = por %p72, %p73
      %s75 = ssub.s32 %s15, %s22
      %p76 = scmp.eq.s32.totalorder %s75, 0
      %s78 = sadd.s32 %s77, 1
      %s79 = scalar_select %p76, %s77, %s78
      %p82 = pneg %p76
      %p83 = scmp.eq.s32.totalorder %s15, 1
      %p84 = por %p82, %p83
      %p85 = scmp.ne.s32.totalorder %s77, %s80
      %p86 = scmp.eq.s32.totalorder %s15, 0
      %p87 = por %p85, %p86
      %p88 = scmp.ne.s32.totalorder %s77, %s80
      %p89 = scmp.eq.s32.totalorder %s20, 1
      %p90 = por %p88, %p89
      %p91 = scmp.ne.s32.totalorder %s80, %s81
      %p92 = scmp.eq.s32.totalorder %s20, 0
      %p93 = por %p91, %p92
      %p94 = scmp.ne.s32.totalorder %s80, %s81
      %p95 = scmp.eq.s32.totalorder %s21, 1
      %p96 = por %p94, %p95
      %p98 = scmp.ne.s32.totalorder %s81, %s97
      %p99 = scmp.eq.s32.totalorder %s21, 0
      %p100 = por %p98, %p99
      %s102 = sadd.s32 %s101, 1
      %p105 = scmp.eq.s32.totalorder %s15, 1
      %p106 = scmp.ne.s32.totalorder %s101, %s103
      %p107 = scmp.eq.s32.totalorder %s15, 0
      %p108 = por %p106, %p107
      %p109 = scmp.ne.s32.totalorder %s101, %s103
      %p110 = scmp.eq.s32.totalorder %s20, 1
      %p111 = por %p109, %p110
      %p112 = scmp.ne.s32.totalorder %s103, %s104
      %p113 = scmp.eq.s32.totalorder %s20, 0
      %p114 = por %p112, %p113
      %p115 = scmp.ne.s32.totalorder %s103, %s104
      %p116 = scmp.eq.s32.totalorder %s21, 1
      %p117 = por %p115, %p116
      %p119 = scmp.ne.s32.totalorder %s104, %s118
      %p120 = scmp.eq.s32.totalorder %s21, 0
      %p121 = por %p119, %p120
      %s123 = sadd.s32 %s122, 1
      %p126 = scmp.eq.s32.totalorder %s15, 1
      %p127 = scmp.ne.s32.totalorder %s122, %s124
      %p128 = scmp.eq.s32.totalorder %s15, 0
      %p129 = por %p127, %p128
      %p130 = scmp.ne.s32.totalorder %s122, %s124
      %p131 = scmp.eq.s32.totalorder %s20, 1
      %p132 = por %p130, %p131
      %p133 = scmp.ne.s32.totalorder %s124, %s125
      %p134 = scmp.eq.s32.totalorder %s20, 0
      %p135 = por %p133, %p134
      %p136 = scmp.ne.s32.totalorder %s124, %s125
      %p137 = scmp.eq.s32.totalorder %s21, 1
      %p138 = por %p136, %p137
      %p140 = scmp.ne.s32.totalorder %s125, %s139
      %p141 = scmp.eq.s32.totalorder %s21, 0
      %p142 = por %p140, %p141
      %s144 = sadd.s32 %s143, 1
      %p147 = scmp.eq.s32.totalorder %s15, 1
      %p148 = scmp.ne.s32.totalorder %s143, %s145
      %p149 = scmp.eq.s32.totalorder %s15, 0
      %p150 = por %p148, %p149
      %p151 = scmp.ne.s32.totalorder %s143, %s145
      %p152 = scmp.eq.s32.totalorder %s20, 1
      %p153 = por %p151, %p152
      %p154 = scmp.ne.s32.totalorder %s145, %s146
      %p155 = scmp.eq.s32.totalorder %s20, 0
      %p156 = por %p154, %p155
      %p157 = scmp.ne.s32.totalorder %s145, %s146
      %p158 = scmp.eq.s32.totalorder %s21, 1
      %p159 = por %p157, %p158
      %p161 = scmp.ne.s32.totalorder %s146, %s160
      %p162 = scmp.eq.s32.totalorder %s21, 0
      %p163 = por %p161, %p162
      %s164 = ssub.s32 %s15, %s22
      %p165 = scmp.eq.s32.totalorder %s164, 0
      %s167 = sadd.s32 %s166, 1
      %s168 = scalar_select %p165, %s166, %s167
      %p171 = pneg %p165
      %p172 = scmp.eq.s32.totalorder %s15, 1
      %p173 = por %p171, %p172
      %p174 = scmp.ne.s32.totalorder %s166, %s169
      %p175 = scmp.eq.s32.totalorder %s15, 0
      %p176 = por %p174, %p175
      %p177 = scmp.ne.s32.totalorder %s166, %s169
      %p178 = scmp.eq.s32.totalorder %s20, 1
      %p179 = por %p177, %p178
      %p180 = scmp.ne.s32.totalorder %s169, %s170
      %p181 = scmp.eq.s32.totalorder %s20, 0
      %p182 = por %p180, %p181
      %p183 = scmp.ne.s32.totalorder %s169, %s170
      %p184 = scmp.eq.s32.totalorder %s21, 1
      %p185 = por %p183, %p184
      %p187 = scmp.ne.s32.totalorder %s170, %s186
      %p188 = scmp.eq.s32.totalorder %s21, 0
      %p189 = por %p187, %p188
      %p190 = scmp.le.s32.totalorder 1, %s15
      %p191 = scmp.lt.s32.totalorder %s15, 3
      %p192 = pnand %p190, %p191
      %p193 = pneg %p192
      // Predicated region
      $region9: #{tpu_custom_call.1} parent=5 // pred_check
        _
      $region10: #{tpu_custom_call.1} parent=5 // pred_check_branch
        %195 = sbr.rel (%p192) target = $region12
      $region11: #{tpu_custom_call.1} parent=5 // pred_region
        %s196 = ssub.s32 %s15, 1
        // Predicated region
        $region13: #{tpu_custom_call.1} parent=11 // pred_check
          %p197 = pneg %p114
        $region14: #{tpu_custom_call.1} parent=11 // pred_check_branch
          %199 = sbr.rel (%p197) target = $region16
        $region15: #{tpu_custom_call.1} parent=11 // pred_region
          _
        $region16: #{tpu_custom_call.1} parent=11 // pred_fallthru
          _
        // Predicated region
        $region17: #{tpu_custom_call.1} parent=11 // pred_check
          %p200 = pneg %p135
        $region18: #{tpu_custom_call.1} parent=11 // pred_check_branch
          %202 = sbr.rel (%p200) target = $region20
        $region19: #{tpu_custom_call.1} parent=11 // pred_region
          _
        $region20: #{tpu_custom_call.1} parent=11 // pred_fallthru
          _
        // Predicated region
        $region21: #{tpu_custom_call.1} parent=11 // pred_check
          %p203 = pneg %p156
        $region22: #{tpu_custom_call.1} parent=11 // pred_check_branch
          %205 = sbr.rel (%p203) target = $region24
        $region23: #{tpu_custom_call.1} parent=11 // pred_region
          _
        $region24: #{tpu_custom_call.1} parent=11 // pred_fallthru
          _
      $region12: #{tpu_custom_call.1} parent=5 // pred_fallthru
        _
      %p206 = scmp.lt.s32.totalorder %s15, 2
      // Predicated region
      $region25: #{tpu_custom_call.1} parent=5 // pred_check
        %p207 = pneg %p206
      $region26: #{tpu_custom_call.1} parent=5 // pred_check_branch
        %209 = sbr.rel (%p207) target = $region28
      $region27: #{tpu_custom_call.1} parent=5 // pred_region
        // Predicated region
        $region29: #{tpu_custom_call.1} parent=27 // pred_check
          %p210 = pneg %p35
        $region30: #{tpu_custom_call.1} parent=27 // pred_check_branch
          %212 = sbr.rel (%p210) target = $region32
        $region31: #{tpu_custom_call.1} parent=27 // pred_region
          %p213 = scmp.lt.s32.totalorder %s15, 1
          %s214 = scalar_select %p213, %s15, 1
          %s215 = smul.addr %s214, 8
          %s216 = scalar_lea.vmem %s0, %s215
        $region32: #{tpu_custom_call.1} parent=27 // pred_fallthru
          _
        // Predicated region
        $region33: #{tpu_custom_call.1} parent=27 // pred_check
          %p217 = pneg %p61
        $region34: #{tpu_custom_call.1} parent=27 // pred_check_branch
          %219 = sbr.rel (%p217) target = $region36
        $region35: #{tpu_custom_call.1} parent=27 // pred_region
          %p220 = scmp.lt.s32.totalorder %s15, 1
          %s221 = scalar_select %p220, %s15, 1
          %s222 = smul.addr %s221, 8
          %s223 = scalar_lea.vmem %s1, %s222
        $region36: #{tpu_custom_call.1} parent=27 // pred_fallthru
          _
        // Predicated region
        $region37: #{tpu_custom_call.1} parent=27 // pred_check
          %p224 = pneg %p87
        $region38: #{tpu_custom_call.1} parent=27 // pred_check_branch
          %226 = sbr.rel (%p224) target = $region40
        $region39: #{tpu_custom_call.1} parent=27 // pred_region
          %p227 = scmp.lt.s32.totalorder %s15, 1
          %s228 = scalar_select %p227, %s15, 1
          %s229 = smul.addr %s228, 8
          %s230 = scalar_lea.vmem %s2, %s229
        $region40: #{tpu_custom_call.1} parent=27 // pred_fallthru
          _
      $region28: #{tpu_custom_call.1} parent=5 // pred_fallthru
        _
      %p231 = scmp.le.s32.totalorder 1, %s15
      %p232 = scmp.lt.s32.totalorder %s15, 3
      %p233 = pnand %p231, %p232
      %p234 = pneg %p233
      // Predicated region
      $region41: #{tpu_custom_call.1} parent=5 // pred_check
        _
      $region42: #{tpu_custom_call.1} parent=5 // pred_check_branch
        %236 = sbr.rel (%p233) target = $region44
      $region43: #{tpu_custom_call.1} parent=5 // pred_region
        %s237 = ssub.s32 %s15, 1
        %p238 = scmp.lt.s32.totalorder %s20, 1
        %s239 = scalar_select %p238, %s20, 1
        %s240 = smul.addr %s239, 8
        %s241 = scalar_lea.vmem %s0, %s240
        %p242 = pneg %p41
        %p243 = pneg %p38
        %p244 = scmp.lt.s32.totalorder %s20, 1
        %s245 = scalar_select %p244, %s20, 1
        %s246 = smul.addr %s245, 8
        %s247 = scalar_lea.vmem %s1, %s246
        %p248 = pneg %p67
        %p249 = pneg %p64
        %p250 = scmp.lt.s32.totalorder %s20, 1
        %s251 = scalar_select %p250, %s20, 1
        %s252 = smul.addr %s251, 8
        %s253 = scalar_lea.vmem %s2, %s252
        %p254 = pneg %p93
        %p255 = pneg %p90
        %p256 = pneg %p114
        %p257 = pneg %p111
        %p258 = pneg %p135
        %p259 = pneg %p132
        %p260 = pneg %p156
        %p261 = pneg %p153
        %p262 = pneg %p182
        %p263 = pneg %p179
        %s264 = sand.u32 %s169, 1
        %s265 = scalar_lea.sflag [#allocation4], %s264
        %s266 = sand.u32 %s169, 1
        %s267 = smul.addr %s266, 8
        %s268 = scalar_lea.vmem [#allocation3], %s267
        %p269 = scmp.lt.s32.totalorder %s20, 1
        %s270 = scalar_select %p269, %s20, 1
        %s271 = smul.addr %s270, 8
        %s272 = scalar_lea.vmem %s0, %s271
        %p273 = scmp.lt.s32.totalorder %s20, 1
        %s274 = scalar_select %p273, %s20, 1
        %s275 = smul.addr %s274, 8
        %s276 = scalar_lea.vmem %s1, %s275
        %p277 = scmp.lt.s32.totalorder %s20, 1
        %s278 = scalar_select %p277, %s20, 1
        %s279 = smul.addr %s278, 8
        %s280 = scalar_lea.vmem %s2, %s279
        %v281 = vld [vmem:[%s272] sm:$0xff]
        %v282 = vld [vmem:[%s276] sm:$0xff]
        %v283 = vld [vmem:[%s280] sm:$0xff]
        %v284 = vld [vmem:[%s3] sm:$0xff]
        %v285 = vld [vmem:[%s3 + $0x8] sm:$0xff]
        %v286 = vld [vmem:[%s3 + $0x10] sm:$0xff]
        %v287 = vld [vmem:[%s3 + $0x18] sm:$0xff]
        %vm288 = vcmask 261120
        %v290 = vsel %vm288, %v281, 0
        %292 = vmatprep.subr.mxu0 0.0
        %293 = vmatpush1.msra.mxu0 0.0
        %294 = vmatprep.subr.mxu0 0.0
        %295 = vmatpush1.msra.mxu0 0.0
        %296 = vmatprep.subr.mxu0 0.0
        %297 = vmatpush1.msra.mxu0 0.0
        %298 = vmatprep.subr.mxu0 0.0
        %299 = vmatpush1.msra.mxu0 0.0
        %300 = vmatprep.subr.mxu0 0.0
        %301 = vmatpush1.msra.mxu0 0.0
        %302 = vmatprep.subr.mxu0 0.0
        %303 = vmatpush1.msra.mxu0 0.0
        %304 = vmatprep.subr.mxu0 0.0
        %305 = vmatpush1.msra.mxu0 0.0
        %306 = vmatprep.subr.mxu0 0.0
        %307 = vmatpush1.msra.mxu0 0.0
        %308 = vmatprep.subr.mxu0 0.0
        %309 = vmatpush1.msra.mxu0 0.0
        %310 = vmatprep.subr.mxu0 0.0
        %311 = vmatpush1.msra.mxu0 0.0
        %312 = vmatprep.subr.mxu0 0.0
        %313 = vmatpush1.msra.mxu0 0.0
        %314 = vmatprep.subr.mxu0 0.0
        %315 = vmatpush1.msra.mxu0 0.0
        %316 = vmatprep.subr.mxu0 0.0
        %317 = vmatpush1.msra.mxu0 %v287
        %318 = vmatprep.subr.mxu0 0.0
        %319 = vmatpush1.msra.mxu0 %v286
        %320 = vmatprep.subr.mxu0 0.0
        %321 = vmatpush1.msra.mxu0 %v285
        %322 = vmatprep.subr.mxu0 0.0
        %323 = vmatpush1.msra.mxu0 %v284
        %324 = vmatprep.subr.mxu0 0.0
        %325 = vmatpush2.msra.mxu0 0.0
        %326 = vmatprep.subr.mxu0 0.0
        %327 = vmatpush2.msra.mxu0 0.0
        %328 = vmatprep.subr.mxu0 0.0
        %329 = vmatpush2.msra.mxu0 0.0
        %330 = vmatprep.subr.mxu0 0.0
        %331 = vmatpush2.msra.mxu0 0.0
        %332 = vmatprep.subr.mxu0 0.0
        %333 = vmatpush2.msra.mxu0 0.0
        %334 = vmatprep.subr.mxu0 0.0
        %335 = vmatpush2.msra.mxu0 0.0
        %336 = vmatprep.subr.mxu0 0.0
        %337 = vmatpush2.msra.mxu0 0.0
        %338 = vmatprep.subr.mxu0 0.0
        %339 = vmatpush2.msra.mxu0 0.0
        %340 = vmatprep.subr.mxu0 0.0
        %341 = vmatpush2.msra.mxu0 0.0
        %342 = vmatprep.subr.mxu0 0.0
        %343 = vmatpush2.msra.mxu0 0.0
        %344 = vmatprep.subr.mxu0 0.0
        %345 = vmatpush2.msra.mxu0 0.0
        %346 = vmatprep.subr.mxu0 0.0
        %347 = vmatpush2.msra.mxu0 0.0
        %348 = vmatprep.subr.mxu0 0.0
        %349 = vmatpush2.msra.mxu0 0.0
        %350 = vmatprep.subr.mxu0 0.0
        %351 = vmatpush2.msra.mxu0 0.0
        %352 = vmatprep.subr.mxu0 0.0
        %353 = vmatpush2.msra.mxu0 0.0
        %354 = vmatprep.subr.mxu0 0.0
        %355 = vmatpush2.msra.mxu0 0.0
        %356 = vmatprep.mubr.f32.mxu0 0.0
        %357 = vmatmul.mubr.f32.gmra.mxu0 %v290
        %v358 = vpop.f32.mrf.mxu0
        %v359 = vadd.f32 0.0, %v358
        %v360 = vpop.f32.mrf.mxu0
        %361 = vdwg.mxu0
        %v362 = vld [vmem:[%s4] sm:$0xff]
        %v363 = vld [vmem:[%s4 + $0x8] sm:$0xff]
        %v364 = vld [vmem:[%s4 + $0x10] sm:$0xff]
        %v365 = vld [vmem:[%s4 + $0x18] sm:$0xff]
        %v367 = vsel %vm288, %v282, 0
        %369 = vmatprep.subr.mxu0 0.0
        %370 = vmatpush1.msra.mxu0 0.0
        %371 = vmatprep.subr.mxu0 0.0
        %372 = vmatpush1.msra.mxu0 0.0
        %373 = vmatprep.subr.mxu0 0.0
        %374 = vmatpush1.msra.mxu0 0.0
        %375 = vmatprep.subr.mxu0 0.0
        %376 = vmatpush1.msra.mxu0 0.0
        %377 = vmatprep.subr.mxu0 0.0
        %378 = vmatpush1.msra.mxu0 0.0
        %379 = vmatprep.subr.mxu0 0.0
        %380 = vmatpush1.msra.mxu0 0.0
        %381 = vmatprep.subr.mxu0 0.0
        %382 = vmatpush1.msra.mxu0 0.0
        %383 = vmatprep.subr.mxu0 0.0
        %384 = vmatpush1.msra.mxu0 0.0
        %385 = vmatprep.subr.mxu0 0.0
        %386 = vmatpush1.msra.mxu0 0.0
        %387 = vmatprep.subr.mxu0 0.0
        %388 = vmatpush1.msra.mxu0 0.0
        %389 = vmatprep.subr.mxu0 0.0
        %390 = vmatpush1.msra.mxu0 0.0
        %391 = vmatprep.subr.mxu0 0.0
        %392 = vmatpush1.msra.mxu0 0.0
        %393 = vmatprep.subr.mxu0 0.0
        %394 = vmatpush1.msra.mxu0 %v365
        %395 = vmatprep.subr.mxu0 0.0
        %396 = vmatpush1.msra.mxu0 %v364
        %397 = vmatprep.subr.mxu0 0.0
        %398 = vmatpush1.msra.mxu0 %v363
        %399 = vmatprep.subr.mxu0 0.0
        %400 = vmatpush1.msra.mxu0 %v362
        %401 = vmatprep.subr.mxu0 0.0
        %402 = vmatpush2.msra.mxu0 0.0
        %403 = vmatprep.subr.mxu0 0.0
        %404 = vmatpush2.msra.mxu0 0.0
        %405 = vmatprep.subr.mxu0 0.0
        %406 = vmatpush2.msra.mxu0 0.0
        %407 = vmatprep.subr.mxu0 0.0
        %408 = vmatpush2.msra.mxu0 0.0
        %409 = vmatprep.subr.mxu0 0.0
        %410 = vmatpush2.msra.mxu0 0.0
        %411 = vmatprep.subr.mxu0 0.0
        %412 = vmatpush2.msra.mxu0 0.0
        %413 = vmatprep.subr.mxu0 0.0
        %414 = vmatpush2.msra.mxu0 0.0
        %415 = vmatprep.subr.mxu0 0.0
        %416 = vmatpush2.msra.mxu0 0.0
        %417 = vmatprep.subr.mxu0 0.0
        %418 = vmatpush2.msra.mxu0 0.0
        %419 = vmatprep.subr.mxu0 0.0
        %420 = vmatpush2.msra.mxu0 0.0
        %421 = vmatprep.subr.mxu0 0.0
        %422 = vmatpush2.msra.mxu0 0.0
        %423 = vmatprep.subr.mxu0 0.0
        %424 = vmatpush2.msra.mxu0 0.0
        %425 = vmatprep.subr.mxu0 0.0
        %426 = vmatpush2.msra.mxu0 0.0
        %427 = vmatprep.subr.mxu0 0.0
        %428 = vmatpush2.msra.mxu0 0.0
        %429 = vmatprep.subr.mxu0 0.0
        %430 = vmatpush2.msra.mxu0 0.0
        %431 = vmatprep.subr.mxu0 0.0
        %432 = vmatpush2.msra.mxu0 0.0
        %433 = vmatprep.mubr.f32.mxu0 0.0
        %434 = vmatmul.mubr.f32.gmra.mxu0 %v367
        %v435 = vpop.f32.mrf.mxu0
        %v436 = vadd.f32 0.0, %v435
        %v437 = vpop.f32.mrf.mxu0
        %438 = vdwg.mxu0
        %v439 = vld [vmem:[%s5] sm:$0xff]
        %v440 = vld [vmem:[%s5 + $0x8] sm:$0xff]
        %v441 = vld [vmem:[%s5 + $0x10] sm:$0xff]
        %v442 = vld [vmem:[%s5 + $0x18] sm:$0xff]
        %v444 = vsel %vm288, %v283, 0
        %446 = vmatprep.subr.mxu0 0.0
        %447 = vmatpush1.msra.mxu0 0.0
        %448 = vmatprep.subr.mxu0 0.0
        %449 = vmatpush1.msra.mxu0 0.0
        %450 = vmatprep.subr.mxu0 0.0
        %451 = vmatpush1.msra.mxu0 0.0
        %452 = vmatprep.subr.mxu0 0.0
        %453 = vmatpush1.msra.mxu0 0.0
        %454 = vmatprep.subr.mxu0 0.0
        %455 = vmatpush1.msra.mxu0 0.0
        %456 = vmatprep.subr.mxu0 0.0
        %457 = vmatpush1.msra.mxu0 0.0
        %458 = vmatprep.subr.mxu0 0.0
        %459 = vmatpush1.msra.mxu0 0.0
        %460 = vmatprep.subr.mxu0 0.0
        %461 = vmatpush1.msra.mxu0 0.0
        %462 = vmatprep.subr.mxu0 0.0
        %463 = vmatpush1.msra.mxu0 0.0
        %464 = vmatprep.subr.mxu0 0.0
        %465 = vmatpush1.msra.mxu0 0.0
        %466 = vmatprep.subr.mxu0 0.0
        %467 = vmatpush1.msra.mxu0 0.0
        %468 = vmatprep.subr.mxu0 0.0
        %469 = vmatpush1.msra.mxu0 0.0
        %470 = vmatprep.subr.mxu0 0.0
        %471 = vmatpush1.msra.mxu0 %v442
        %472 = vmatprep.subr.mxu0 0.0
        %473 = vmatpush1.msra.mxu0 %v441
        %474 = vmatprep.subr.mxu0 0.0
        %475 = vmatpush1.msra.mxu0 %v440
        %476 = vmatprep.subr.mxu0 0.0
        %477 = vmatpush1.msra.mxu0 %v439
        %478 = vmatprep.subr.mxu0 0.0
        %479 = vmatpush2.msra.mxu0 0.0
        %480 = vmatprep.subr.mxu0 0.0
        %481 = vmatpush2.msra.mxu0 0.0
        %482 = vmatprep.subr.mxu0 0.0
        %483 = vmatpush2.msra.mxu0 0.0
        %484 = vmatprep.subr.mxu0 0.0
        %485 = vmatpush2.msra.mxu0 0.0
        %486 = vmatprep.subr.mxu0 0.0
        %487 = vmatpush2.msra.mxu0 0.0
        %488 = vmatprep.subr.mxu0 0.0
        %489 = vmatpush2.msra.mxu0 0.0
        %490 = vmatprep.subr.mxu0 0.0
        %491 = vmatpush2.msra.mxu0 0.0
        %492 = vmatprep.subr.mxu0 0.0
        %493 = vmatpush2.msra.mxu0 0.0
        %494 = vmatprep.subr.mxu0 0.0
        %495 = vmatpush2.msra.mxu0 0.0
        %496 = vmatprep.subr.mxu0 0.0
        %497 = vmatpush2.msra.mxu0 0.0
        %498 = vmatprep.subr.mxu0 0.0
        %499 = vmatpush2.msra.mxu0 0.0
        %500 = vmatprep.subr.mxu0 0.0
        %501 = vmatpush2.msra.mxu0 0.0
        %502 = vmatprep.subr.mxu0 0.0
        %503 = vmatpush2.msra.mxu0 0.0
        %504 = vmatprep.subr.mxu0 0.0
        %505 = vmatpush2.msra.mxu0 0.0
        %506 = vmatprep.subr.mxu0 0.0
        %507 = vmatpush2.msra.mxu0 0.0
        %508 = vmatprep.subr.mxu0 0.0
        %509 = vmatpush2.msra.mxu0 0.0
        %510 = vmatprep.mubr.f32.mxu0 0.0
        %511 = vmatmul.mubr.f32.gmra.mxu0 %v444
        %v512 = vpop.f32.mrf.mxu0
        %v513 = vadd.f32 0.0, %v512
        %v514 = vpop.f32.mrf.mxu0
        %515 = vdwg.mxu0
        %vm516 = vcmask 64512
        %v518 = vsel %vm516, %v359, 0
        %v521 = vsel %vm516, %v436, 0
        %523 = vmatprep.subr.mxu0 0.0
        %524 = vmatpush1.xpose.msra.mxu0 0.0
        %525 = vmatprep.subr.mxu0 0.0
        %526 = vmatpush1.xpose.msra.mxu0 0.0
        %527 = vmatprep.subr.mxu0 0.0
        %528 = vmatpush1.xpose.msra.mxu0 0.0
        %529 = vmatprep.subr.mxu0 0.0
        %530 = vmatpush1.xpose.msra.mxu0 0.0
        %531 = vmatprep.subr.mxu0 0.0
        %532 = vmatpush1.xpose.msra.mxu0 0.0
        %533 = vmatprep.subr.mxu0 0.0
        %534 = vmatpush1.xpose.msra.mxu0 0.0
        %535 = vmatprep.subr.mxu0 0.0
        %536 = vmatpush1.xpose.msra.mxu0 0.0
        %537 = vmatprep.subr.mxu0 0.0
        %538 = vmatpush1.xpose.msra.mxu0 0.0
        %539 = vmatprep.subr.mxu0 0.0
        %540 = vmatpush1.xpose.msra.mxu0 0.0
        %541 = vmatprep.subr.mxu0 0.0
        %542 = vmatpush1.xpose.msra.mxu0 0.0
        %543 = vmatprep.subr.mxu0 0.0
        %544 = vmatpush1.xpose.msra.mxu0 0.0
        %545 = vmatprep.subr.mxu0 0.0
        %546 = vmatpush1.xpose.msra.mxu0 0.0
        %547 = vmatprep.subr.mxu0 0.0
        %548 = vmatpush1.xpose.msra.mxu0 0.0
        %549 = vmatprep.subr.mxu0 0.0
        %550 = vmatpush1.xpose.msra.mxu0 0.0
        %551 = vmatprep.subr.mxu0 0.0
        %552 = vmatpush1.xpose.msra.mxu0 0.0
        %553 = vmatprep.subr.mxu0 0.0
        %554 = vmatpush1.xpose.msra.mxu0 %v521
        %555 = vmatprep.subr.mxu0 0.0
        %556 = vmatpush2.xpose.msra.mxu0 0.0
        %557 = vmatprep.subr.mxu0 0.0
        %558 = vmatpush2.xpose.msra.mxu0 0.0
        %559 = vmatprep.subr.mxu0 0.0
        %560 = vmatpush2.xpose.msra.mxu0 0.0
        %561 = vmatprep.subr.mxu0 0.0
        %562 = vmatpush2.xpose.msra.mxu0 0.0
        %563 = vmatprep.subr.mxu0 0.0
        %564 = vmatpush2.xpose.msra.mxu0 0.0
        %565 = vmatprep.subr.mxu0 0.0
        %566 = vmatpush2.xpose.msra.mxu0 0.0
        %567 = vmatprep.subr.mxu0 0.0
        %568 = vmatpush2.xpose.msra.mxu0 0.0
        %569 = vmatprep.subr.mxu0 0.0
        %570 = vmatpush2.xpose.msra.mxu0 0.0
        %571 = vmatprep.subr.mxu0 0.0
        %572 = vmatpush2.xpose.msra.mxu0 0.0
        %573 = vmatprep.subr.mxu0 0.0
        %574 = vmatpush2.xpose.msra.mxu0 0.0
        %575 = vmatprep.subr.mxu0 0.0
        %576 = vmatpush2.xpose.msra.mxu0 0.0
        %577 = vmatprep.subr.mxu0 0.0
        %578 = vmatpush2.xpose.msra.mxu0 0.0
        %579 = vmatprep.subr.mxu0 0.0
        %580 = vmatpush2.xpose.msra.mxu0 0.0
        %581 = vmatprep.subr.mxu0 0.0
        %582 = vmatpush2.xpose.msra.mxu0 0.0
        %583 = vmatprep.subr.mxu0 0.0
        %584 = vmatpush2.xpose.msra.mxu0 0.0
        %585 = vmatprep.subr.mxu0 0.0
        %586 = vmatpush2.xpose.msra.mxu0 0.0
        %587 = vmatprep.mubr.f32.mxu0 0.0
        %588 = vmatmul.mubr.f32.gmra.mxu0 %v518
        %v589 = vpop.f32.mrf.mxu0
        %v590 = vadd.f32 0.0, %v589
        %v591 = vpop.f32.mrf.mxu0
        %592 = vdwg.mxu0
        %v593 = vsel %vm516, %v590, -inf
        %594 = vmax.xlane.f32.xlu0 %v593
        %v595 = vpop.xlane.xlu0 %594
        %v596 = vsub.f32 %v590, %v595
        %v597 = vmul.f32 %v596, 1.442695
        %v598 = vpow.pop %v597
        %v599 = vsel %vm516, %v598, 0.0
        %600 = vadd.xlane.f32.xlu0 %v599
        %v601 = vpop.xlane.xlu0 %600
        %v602 = vrcp.pop %v601
        %v603 = vmul.f32 %v598, %v602
        %v605 = vsel %vm516, %v603, 0
        %607 = vmatprep.subr.mxu0 0.0
        %608 = vmatpush1.msra.mxu0 0.0
        %609 = vmatprep.subr.mxu0 0.0
        %610 = vmatpush1.msra.mxu0 0.0
        %611 = vmatprep.subr.mxu0 0.0
        %612 = vmatpush1.msra.mxu0 0.0
        %613 = vmatprep.subr.mxu0 0.0
        %614 = vmatpush1.msra.mxu0 0.0
        %615 = vmatprep.subr.mxu0 0.0
        %616 = vmatpush1.msra.mxu0 0.0
        %617 = vmatprep.subr.mxu0 0.0
        %618 = vmatpush1.msra.mxu0 0.0
        %619 = vmatprep.subr.mxu0 0.0
        %620 = vmatpush1.msra.mxu0 0.0
        %621 = vmatprep.subr.mxu0 0.0
        %622 = vmatpush1.msra.mxu0 0.0
        %623 = vmatprep.subr.mxu0 0.0
        %624 = vmatpush1.msra.mxu0 0.0
        %625 = vmatprep.subr.mxu0 0.0
        %626 = vmatpush1.msra.mxu0 0.0
        %627 = vmatprep.subr.mxu0 0.0
        %628 = vmatpush1.msra.mxu0 0.0
        %629 = vmatprep.subr.mxu0 0.0
        %630 = vmatpush1.msra.mxu0 0.0
        %631 = vmatprep.subr.mxu0 0.0
        %632 = vmatpush1.msra.mxu0 0.0
        %633 = vmatprep.subr.mxu0 0.0
        %634 = vmatpush1.msra.mxu0 0.0
        %635 = vmatprep.subr.mxu0 0.0
        %636 = vmatpush1.msra.mxu0 0.0
        %637 = vmatprep.subr.mxu0 0.0
        %638 = vmatpush1.msra.mxu0 %v513
        %639 = vmatprep.subr.mxu0 0.0
        %640 = vmatpush2.msra.mxu0 0.0
        %641 = vmatprep.subr.mxu0 0.0
        %642 = vmatpush2.msra.mxu0 0.0
        %643 = vmatprep.subr.mxu0 0.0
        %644 = vmatpush2.msra.mxu0 0.0
        %645 = vmatprep.subr.mxu0 0.0
        %646 = vmatpush2.msra.mxu0 0.0
        %647 = vmatprep.subr.mxu0 0.0
        %648 = vmatpush2.msra.mxu0 0.0
        %649 = vmatprep.subr.mxu0 0.0
        %650 = vmatpush2.msra.mxu0 0.0
        %651 = vmatprep.subr.mxu0 0.0
        %652 = vmatpush2.msra.mxu0 0.0
        %653 = vmatprep.subr.mxu0 0.0
        %654 = vmatpush2.msra.mxu0 0.0
        %655 = vmatprep.subr.mxu0 0.0
        %656 = vmatpush2.msra.mxu0 0.0
        %657 = vmatprep.subr.mxu0 0.0
        %658 = vmatpush2.msra.mxu0 0.0
        %659 = vmatprep.subr.mxu0 0.0
        %660 = vmatpush2.msra.mxu0 0.0
        %661 = vmatprep.subr.mxu0 0.0
        %662 = vmatpush2.msra.mxu0 0.0
        %663 = vmatprep.subr.mxu0 0.0
        %664 = vmatpush2.msra.mxu0 0.0
        %665 = vmatprep.subr.mxu0 0.0
        %666 = vmatpush2.msra.mxu0 0.0
        %667 = vmatprep.subr.mxu0 0.0
        %668 = vmatpush2.msra.mxu0 0.0
        %669 = vmatprep.subr.mxu0 0.0
        %670 = vmatpush2.msra.mxu0 0.0
        %671 = vmatprep.mubr.f32.mxu0 0.0
        %672 = vmatmul.mubr.f32.gmra.mxu0 %v605
        %v673 = vpop.f32.mrf.mxu0
        %v674 = vadd.f32 0.0, %v673
        %v675 = vpop.f32.mrf.mxu0
        %676 = vdwg.mxu0
        %677 = vst.msk [vmem:[#allocation2] sm:$0xff] %vm516, %v674
        %s678 = scalar_lea.vmem %s3, 32
        %v679 = vld [vmem:[%s678] sm:$0xff]
        %v680 = vld [vmem:[%s678 + $0x8] sm:$0xff]
        %v681 = vld [vmem:[%s678 + $0x10] sm:$0xff]
        %v682 = vld [vmem:[%s678 + $0x18] sm:$0xff]
        %683 = vmatprep.subr.mxu0 0.0
        %684 = vmatpush1.msra.mxu0 0.0
        %685 = vmatprep.subr.mxu0 0.0
        %686 = vmatpush1.msra.mxu0 0.0
        %687 = vmatprep.subr.mxu0 0.0
        %688 = vmatpush1.msra.mxu0 0.0
        %689 = vmatprep.subr.mxu0 0.0
        %690 = vmatpush1.msra.mxu0 0.0
        %691 = vmatprep.subr.mxu0 0.0
        %692 = vmatpush1.msra.mxu0 0.0
        %693 = vmatprep.subr.mxu0 0.0
        %694 = vmatpush1.msra.mxu0 0.0
        %695 = vmatprep.subr.mxu0 0.0
        %696 = vmatpush1.msra.mxu0 0.0
        %697 = vmatprep.subr.mxu0 0.0
        %698 = vmatpush1.msra.mxu0 0.0
        %699 = vmatprep.subr.mxu0 0.0
        %700 = vmatpush1.msra.mxu0 0.0
        %701 = vmatprep.subr.mxu0 0.0
        %702 = vmatpush1.msra.mxu0 0.0
        %703 = vmatprep.subr.mxu0 0.0
        %704 = vmatpush1.msra.mxu0 0.0
        %705 = vmatprep.subr.mxu0 0.0
        %706 = vmatpush1.msra.mxu0 0.0
        %707 = vmatprep.subr.mxu0 0.0
        %708 = vmatpush1.msra.mxu0 %v682
        %709 = vmatprep.subr.mxu0 0.0
        %710 = vmatpush1.msra.mxu0 %v681
        %711 = vmatprep.subr.mxu0 0.0
        %712 = vmatpush1.msra.mxu0 %v680
        %713 = vmatprep.subr.mxu0 0.0
        %714 = vmatpush1.msra.mxu0 %v679
        %715 = vmatprep.subr.mxu0 0.0
        %716 = vmatpush2.msra.mxu0 0.0
        %717 = vmatprep.subr.mxu0 0.0
        %718 = vmatpush2.msra.mxu0 0.0
        %719 = vmatprep.subr.mxu0 0.0
        %720 = vmatpush2.msra.mxu0 0.0
        %721 = vmatprep.subr.mxu0 0.0
        %722 = vmatpush2.msra.mxu0 0.0
        %723 = vmatprep.subr.mxu0 0.0
        %724 = vmatpush2.msra.mxu0 0.0
        %725 = vmatprep.subr.mxu0 0.0
        %726 = vmatpush2.msra.mxu0 0.0
        %727 = vmatprep.subr.mxu0 0.0
        %728 = vmatpush2.msra.mxu0 0.0
        %729 = vmatprep.subr.mxu0 0.0
        %730 = vmatpush2.msra.mxu0 0.0
        %731 = vmatprep.subr.mxu0 0.0
        %732 = vmatpush2.msra.mxu0 0.0
        %733 = vmatprep.subr.mxu0 0.0
        %734 = vmatpush2.msra.mxu0 0.0
        %735 = vmatprep.subr.mxu0 0.0
        %736 = vmatpush2.msra.mxu0 0.0
        %737 = vmatprep.subr.mxu0 0.0
        %738 = vmatpush2.msra.mxu0 0.0
        %739 = vmatprep.subr.mxu0 0.0
        %740 = vmatpush2.msra.mxu0 0.0
        %741 = vmatprep.subr.mxu0 0.0
        %742 = vmatpush2.msra.mxu0 0.0
        %743 = vmatprep.subr.mxu0 0.0
        %744 = vmatpush2.msra.mxu0 0.0
        %745 = vmatprep.subr.mxu0 0.0
        %746 = vmatpush2.msra.mxu0 0.0
        %747 = vmatprep.mubr.f32.mxu0 0.0
        %748 = vmatmul.mubr.f32.gmra.mxu0 %v290
        %v749 = vpop.f32.mrf.mxu0
        %v750 = vadd.f32 0.0, %v749
        %v751 = vpop.f32.mrf.mxu0
        %752 = vdwg.mxu0
        %s753 = scalar_lea.vmem %s4, 32
        %v754 = vld [vmem:[%s753] sm:$0xff]
        %v755 = vld [vmem:[%s753 + $0x8] sm:$0xff]
        %v756 = vld [vmem:[%s753 + $0x10] sm:$0xff]
        %v757 = vld [vmem:[%s753 + $0x18] sm:$0xff]
        %758 = vmatprep.subr.mxu0 0.0
        %759 = vmatpush1.msra.mxu0 0.0
        %760 = vmatprep.subr.mxu0 0.0
        %761 = vmatpush1.msra.mxu0 0.0
        %762 = vmatprep.subr.mxu0 0.0
        %763 = vmatpush1.msra.mxu0 0.0
        %764 = vmatprep.subr.mxu0 0.0
        %765 = vmatpush1.msra.mxu0 0.0
        %766 = vmatprep.subr.mxu0 0.0
        %767 = vmatpush1.msra.mxu0 0.0
        %768 = vmatprep.subr.mxu0 0.0
        %769 = vmatpush1.msra.mxu0 0.0
        %770 = vmatprep.subr.mxu0 0.0
        %771 = vmatpush1.msra.mxu0 0.0
        %772 = vmatprep.subr.mxu0 0.0
        %773 = vmatpush1.msra.mxu0 0.0
        %774 = vmatprep.subr.mxu0 0.0
        %775 = vmatpush1.msra.mxu0 0.0
        %776 = vmatprep.subr.mxu0 0.0
        %777 = vmatpush1.msra.mxu0 0.0
        %778 = vmatprep.subr.mxu0 0.0
        %779 = vmatpush1.msra.mxu0 0.0
        %780 = vmatprep.subr.mxu0 0.0
        %781 = vmatpush1.msra.mxu0 0.0
        %782 = vmatprep.subr.mxu0 0.0
        %783 = vmatpush1.msra.mxu0 %v757
        %784 = vmatprep.subr.mxu0 0.0
        %785 = vmatpush1.msra.mxu0 %v756
        %786 = vmatprep.subr.mxu0 0.0
        %787 = vmatpush1.msra.mxu0 %v755
        %788 = vmatprep.subr.mxu0 0.0
        %789 = vmatpush1.msra.mxu0 %v754
        %790 = vmatprep.subr.mxu0 0.0
        %791 = vmatpush2.msra.mxu0 0.0
        %792 = vmatprep.subr.mxu0 0.0
        %793 = vmatpush2.msra.mxu0 0.0
        %794 = vmatprep.subr.mxu0 0.0
        %795 = vmatpush2.msra.mxu0 0.0
        %796 = vmatprep.subr.mxu0 0.0
        %797 = vmatpush2.msra.mxu0 0.0
        %798 = vmatprep.subr.mxu0 0.0
        %799 = vmatpush2.msra.mxu0 0.0
        %800 = vmatprep.subr.mxu0 0.0
        %801 = vmatpush2.msra.mxu0 0.0
        %802 = vmatprep.subr.mxu0 0.0
        %803 = vmatpush2.msra.mxu0 0.0
        %804 = vmatprep.subr.mxu0 0.0
        %805 = vmatpush2.msra.mxu0 0.0
        %806 = vmatprep.subr.mxu0 0.0
        %807 = vmatpush2.msra.mxu0 0.0
        %808 = vmatprep.subr.mxu0 0.0
        %809 = vmatpush2.msra.mxu0 0.0
        %810 = vmatprep.subr.mxu0 0.0
        %811 = vmatpush2.msra.mxu0 0.0
        %812 = vmatprep.subr.mxu0 0.0
        %813 = vmatpush2.msra.mxu0 0.0
        %814 = vmatprep.subr.mxu0 0.0
        %815 = vmatpush2.msra.mxu0 0.0
        %816 = vmatprep.subr.mxu0 0.0
        %817 = vmatpush2.msra.mxu0 0.0
        %818 = vmatprep.subr.mxu0 0.0
        %819 = vmatpush2.msra.mxu0 0.0
        %820 = vmatprep.subr.mxu0 0.0
        %821 = vmatpush2.msra.mxu0 0.0
        %822 = vmatprep.mubr.f32.mxu0 0.0
        %823 = vmatmul.mubr.f32.gmra.mxu0 %v367
        %v824 = vpop.f32.mrf.mxu0
        %v825 = vadd.f32 0.0, %v824
        %v826 = vpop.f32.mrf.mxu0
        %827 = vdwg.mxu0
        %s828 = scalar_lea.vmem %s5, 32
        %v829 = vld [vmem:[%s828] sm:$0xff]
        %v830 = vld [vmem:[%s828 + $0x8] sm:$0xff]
        %v831 = vld [vmem:[%s828 + $0x10] sm:$0xff]
        %v832 = vld [vmem:[%s828 + $0x18] sm:$0xff]
        %833 = vmatprep.subr.mxu0 0.0
        %834 = vmatpush1.msra.mxu0 0.0
        %835 = vmatprep.subr.mxu0 0.0
        %836 = vmatpush1.msra.mxu0 0.0
        %837 = vmatprep.subr.mxu0 0.0
        %838 = vmatpush1.msra.mxu0 0.0
        %839 = vmatprep.subr.mxu0 0.0
        %840 = vmatpush1.msra.mxu0 0.0
        %841 = vmatprep.subr.mxu0 0.0
        %842 = vmatpush1.msra.mxu0 0.0
        %843 = vmatprep.subr.mxu0 0.0
        %844 = vmatpush1.msra.mxu0 0.0
        %845 = vmatprep.subr.mxu0 0.0
        %846 = vmatpush1.msra.mxu0 0.0
        %847 = vmatprep.subr.mxu0 0.0
        %848 = vmatpush1.msra.mxu0 0.0
        %849 = vmatprep.subr.mxu0 0.0
        %850 = vmatpush1.msra.mxu0 0.0
        %851 = vmatprep.subr.mxu0 0.0
        %852 = vmatpush1.msra.mxu0 0.0
        %853 = vmatprep.subr.mxu0 0.0
        %854 = vmatpush1.msra.mxu0 0.0
        %855 = vmatprep.subr.mxu0 0.0
        %856 = vmatpush1.msra.mxu0 0.0
        %857 = vmatprep.subr.mxu0 0.0
        %858 = vmatpush1.msra.mxu0 %v832
        %859 = vmatprep.subr.mxu0 0.0
        %860 = vmatpush1.msra.mxu0 %v831
        %861 = vmatprep.subr.mxu0 0.0
        %862 = vmatpush1.msra.mxu0 %v830
        %863 = vmatprep.subr.mxu0 0.0
        %864 = vmatpush1.msra.mxu0 %v829
        %865 = vmatprep.subr.mxu0 0.0
        %866 = vmatpush2.msra.mxu0 0.0
        %867 = vmatprep.subr.mxu0 0.0
        %868 = vmatpush2.msra.mxu0 0.0
        %869 = vmatprep.subr.mxu0 0.0
        %870 = vmatpush2.msra.mxu0 0.0
        %871 = vmatprep.subr.mxu0 0.0
        %872 = vmatpush2.msra.mxu0 0.0
        %873 = vmatprep.subr.mxu0 0.0
        %874 = vmatpush2.msra.mxu0 0.0
        %875 = vmatprep.subr.mxu0 0.0
        %876 = vmatpush2.msra.mxu0 0.0
        %877 = vmatprep.subr.mxu0 0.0
        %878 = vmatpush2.msra.mxu0 0.0
        %879 = vmatprep.subr.mxu0 0.0
        %880 = vmatpush2.msra.mxu0 0.0
        %881 = vmatprep.subr.mxu0 0.0
        %882 = vmatpush2.msra.mxu0 0.0
        %883 = vmatprep.subr.mxu0 0.0
        %884 = vmatpush2.msra.mxu0 0.0
        %885 = vmatprep.subr.mxu0 0.0
        %886 = vmatpush2.msra.mxu0 0.0
        %887 = vmatprep.subr.mxu0 0.0
        %888 = vmatpush2.msra.mxu0 0.0
        %889 = vmatprep.subr.mxu0 0.0
        %890 = vmatpush2.msra.mxu0 0.0
        %891 = vmatprep.subr.mxu0 0.0
        %892 = vmatpush2.msra.mxu0 0.0
        %893 = vmatprep.subr.mxu0 0.0
        %894 = vmatpush2.msra.mxu0 0.0
        %895 = vmatprep.subr.mxu0 0.0
        %896 = vmatpush2.msra.mxu0 0.0
        %897 = vmatprep.mubr.f32.mxu0 0.0
        %898 = vmatmul.mubr.f32.gmra.mxu0 %v444
        %v899 = vpop.f32.mrf.mxu0
        %v900 = vadd.f32 0.0, %v899
        %v901 = vpop.f32.mrf.mxu0
        %902 = vdwg.mxu0
        %v904 = vsel %vm516, %v750, 0
        %v907 = vsel %vm516, %v825, 0
        %909 = vmatprep.subr.mxu0 0.0
        %910 = vmatpush1.xpose.msra.mxu0 0.0
        %911 = vmatprep.subr.mxu0 0.0
        %912 = vmatpush1.xpose.msra.mxu0 0.0
        %913 = vmatprep.subr.mxu0 0.0
        %914 = vmatpush1.xpose.msra.mxu0 0.0
        %915 = vmatprep.subr.mxu0 0.0
        %916 = vmatpush1.xpose.msra.mxu0 0.0
        %917 = vmatprep.subr.mxu0 0.0
        %918 = vmatpush1.xpose.msra.mxu0 0.0
        %919 = vmatprep.subr.mxu0 0.0
        %920 = vmatpush1.xpose.msra.mxu0 0.0
        %921 = vmatprep.subr.mxu0 0.0
        %922 = vmatpush1.xpose.msra.mxu0 0.0
        %923 = vmatprep.subr.mxu0 0.0
        %924 = vmatpush1.xpose.msra.mxu0 0.0
        %925 = vmatprep.subr.mxu0 0.0
        %926 = vmatpush1.xpose.msra.mxu0 0.0
        %927 = vmatprep.subr.mxu0 0.0
        %928 = vmatpush1.xpose.msra.mxu0 0.0
        %929 = vmatprep.subr.mxu0 0.0
        %930 = vmatpush1.xpose.msra.mxu0 0.0
        %931 = vmatprep.subr.mxu0 0.0
        %932 = vmatpush1.xpose.msra.mxu0 0.0
        %933 = vmatprep.subr.mxu0 0.0
        %934 = vmatpush1.xpose.msra.mxu0 0.0
        %935 = vmatprep.subr.mxu0 0.0
        %936 = vmatpush1.xpose.msra.mxu0 0.0
        %937 = vmatprep.subr.mxu0 0.0
        %938 = vmatpush1.xpose.msra.mxu0 0.0
        %939 = vmatprep.subr.mxu0 0.0
        %940 = vmatpush1.xpose.msra.mxu0 %v907
        %941 = vmatprep.subr.mxu0 0.0
        %942 = vmatpush2.xpose.msra.mxu0 0.0
        %943 = vmatprep.subr.mxu0 0.0
        %944 = vmatpush2.xpose.msra.mxu0 0.0
        %945 = vmatprep.subr.mxu0 0.0
        %946 = vmatpush2.xpose.msra.mxu0 0.0
        %947 = vmatprep.subr.mxu0 0.0
        %948 = vmatpush2.xpose.msra.mxu0 0.0
        %949 = vmatprep.subr.mxu0 0.0
        %950 = vmatpush2.xpose.msra.mxu0 0.0
        %951 = vmatprep.subr.mxu0 0.0
        %952 = vmatpush2.xpose.msra.mxu0 0.0
        %953 = vmatprep.subr.mxu0 0.0
        %954 = vmatpush2.xpose.msra.mxu0 0.0
        %955 = vmatprep.subr.mxu0 0.0
        %956 = vmatpush2.xpose.msra.mxu0 0.0
        %957 = vmatprep.subr.mxu0 0.0
        %958 = vmatpush2.xpose.msra.mxu0 0.0
        %959 = vmatprep.subr.mxu0 0.0
        %960 = vmatpush2.xpose.msra.mxu0 0.0
        %961 = vmatprep.subr.mxu0 0.0
        %962 = vmatpush2.xpose.msra.mxu0 0.0
        %963 = vmatprep.subr.mxu0 0.0
        %964 = vmatpush2.xpose.msra.mxu0 0.0
        %965 = vmatprep.subr.mxu0 0.0
        %966 = vmatpush2.xpose.msra.mxu0 0.0
        %967 = vmatprep.subr.mxu0 0.0
        %968 = vmatpush2.xpose.msra.mxu0 0.0
        %969 = vmatprep.subr.mxu0 0.0
        %970 = vmatpush2.xpose.msra.mxu0 0.0
        %971 = vmatprep.subr.mxu0 0.0
        %972 = vmatpush2.xpose.msra.mxu0 0.0
        %973 = vmatprep.mubr.f32.mxu0 0.0
        %974 = vmatmul.mubr.f32.gmra.mxu0 %v904
        %v975 = vpop.f32.mrf.mxu0
        %v976 = vadd.f32 0.0, %v975
        %v977 = vpop.f32.mrf.mxu0
        %978 = vdwg.mxu0
        %v979 = vsel %vm516, %v976, -inf
        %980 = vmax.xlane.f32.xlu0 %v979
        %v981 = vpop.xlane.xlu0 %980
        %v982 = vsub.f32 %v976, %v981
        %v983 = vmul.f32 %v982, 1.442695
        %v984 = vpow.pop %v983
        %v985 = vsel %vm516, %v984, 0.0
        %986 = vadd.xlane.f32.xlu0 %v985
        %v987 = vpop.xlane.xlu0 %986
        %v988 = vrcp.pop %v987
        %v989 = vmul.f32 %v984, %v988
        %v991 = vsel %vm516, %v989, 0
        %993 = vmatprep.subr.mxu0 0.0
        %994 = vmatpush1.msra.mxu0 0.0
        %995 = vmatprep.subr.mxu0 0.0
        %996 = vmatpush1.msra.mxu0 0.0
        %997 = vmatprep.subr.mxu0 0.0
        %998 = vmatpush1.msra.mxu0 0.0
        %999 = vmatprep.subr.mxu0 0.0
        %1000 = vmatpush1.msra.mxu0 0.0
        %1001 = vmatprep.subr.mxu0 0.0
        %1002 = vmatpush1.msra.mxu0 0.0
        %1003 = vmatprep.subr.mxu0 0.0
        %1004 = vmatpush1.msra.mxu0 0.0
        %1005 = vmatprep.subr.mxu0 0.0
        %1006 = vmatpush1.msra.mxu0 0.0
        %1007 = vmatprep.subr.mxu0 0.0
        %1008 = vmatpush1.msra.mxu0 0.0
        %1009 = vmatprep.subr.mxu0 0.0
        %1010 = vmatpush1.msra.mxu0 0.0
        %1011 = vmatprep.subr.mxu0 0.0
        %1012 = vmatpush1.msra.mxu0 0.0
        %1013 = vmatprep.subr.mxu0 0.0
        %1014 = vmatpush1.msra.mxu0 0.0
        %1015 = vmatprep.subr.mxu0 0.0
        %1016 = vmatpush1.msra.mxu0 0.0
        %1017 = vmatprep.subr.mxu0 0.0
        %1018 = vmatpush1.msra.mxu0 0.0
        %1019 = vmatprep.subr.mxu0 0.0
        %1020 = vmatpush1.msra.mxu0 0.0
        %1021 = vmatprep.subr.mxu0 0.0
        %1022 = vmatpush1.msra.mxu0 0.0
        %1023 = vmatprep.subr.mxu0 0.0
        %1024 = vmatpush1.msra.mxu0 %v900
        %1025 = vmatprep.subr.mxu0 0.0
        %1026 = vmatpush2.msra.mxu0 0.0
        %1027 = vmatprep.subr.mxu0 0.0
        %1028 = vmatpush2.msra.mxu0 0.0
        %1029 = vmatprep.subr.mxu0 0.0
        %1030 = vmatpush2.msra.mxu0 0.0
        %1031 = vmatprep.subr.mxu0 0.0
        %1032 = vmatpush2.msra.mxu0 0.0
        %1033 = vmatprep.subr.mxu0 0.0
        %1034 = vmatpush2.msra.mxu0 0.0
        %1035 = vmatprep.subr.mxu0 0.0
        %1036 = vmatpush2.msra.mxu0 0.0
        %1037 = vmatprep.subr.mxu0 0.0
        %1038 = vmatpush2.msra.mxu0 0.0
        %1039 = vmatprep.subr.mxu0 0.0
        %1040 = vmatpush2.msra.mxu0 0.0
        %1041 = vmatprep.subr.mxu0 0.0
        %1042 = vmatpush2.msra.mxu0 0.0
        %1043 = vmatprep.subr.mxu0 0.0
        %1044 = vmatpush2.msra.mxu0 0.0
        %1045 = vmatprep.subr.mxu0 0.0
        %1046 = vmatpush2.msra.mxu0 0.0
        %1047 = vmatprep.subr.mxu0 0.0
        %1048 = vmatpush2.msra.mxu0 0.0
        %1049 = vmatprep.subr.mxu0 0.0
        %1050 = vmatpush2.msra.mxu0 0.0
        %1051 = vmatprep.subr.mxu0 0.0
        %1052 = vmatpush2.msra.mxu0 0.0
        %1053 = vmatprep.subr.mxu0 0.0
        %1054 = vmatpush2.msra.mxu0 0.0
        %1055 = vmatprep.subr.mxu0 0.0
        %1056 = vmatpush2.msra.mxu0 0.0
        %1057 = vmatprep.mubr.f32.mxu0 0.0
        %1058 = vmatmul.mubr.f32.gmra.mxu0 %v991
        %v1059 = vpop.f32.mrf.mxu0
        %v1060 = vadd.f32 0.0, %v1059
        %v1061 = vpop.f32.mrf.mxu0
        %1062 = vdwg.mxu0
        %1064 = vrot.lane.b32.xlu0 %v1060, 8
        %v1065 = vpop.permute.xlu0 %1064
        %vm1067 = vcmask 130112
        %1068 = vst.msk [vmem:[#allocation2] sm:$0xff] %vm1067, %v1065
        %s1069 = scalar_lea.vmem %s3, 64
        %v1070 = vld [vmem:[%s1069] sm:$0xff]
        %v1071 = vld [vmem:[%s1069 + $0x8] sm:$0xff]
        %v1072 = vld [vmem:[%s1069 + $0x10] sm:$0xff]
        %v1073 = vld [vmem:[%s1069 + $0x18] sm:$0xff]
        %1074 = vmatprep.subr.mxu0 0.0
        %1075 = vmatpush1.msra.mxu0 0.0
        %1076 = vmatprep.subr.mxu0 0.0
        %1077 = vmatpush1.msra.mxu0 0.0
        %1078 = vmatprep.subr.mxu0 0.0
        %1079 = vmatpush1.msra.mxu0 0.0
        %1080 = vmatprep.subr.mxu0 0.0
        %1081 = vmatpush1.msra.mxu0 0.0
        %1082 = vmatprep.subr.mxu0 0.0
        %1083 = vmatpush1.msra.mxu0 0.0
        %1084 = vmatprep.subr.mxu0 0.0
        %1085 = vmatpush1.msra.mxu0 0.0
        %1086 = vmatprep.subr.mxu0 0.0
        %1087 = vmatpush1.msra.mxu0 0.0
        %1088 = vmatprep.subr.mxu0 0.0
        %1089 = vmatpush1.msra.mxu0 0.0
        %1090 = vmatprep.subr.mxu0 0.0
        %1091 = vmatpush1.msra.mxu0 0.0
        %1092 = vmatprep.subr.mxu0 0.0
        %1093 = vmatpush1.msra.mxu0 0.0
        %1094 = vmatprep.subr.mxu0 0.0
        %1095 = vmatpush1.msra.mxu0 0.0
        %1096 = vmatprep.subr.mxu0 0.0
        %1097 = vmatpush1.msra.mxu0 0.0
        %1098 = vmatprep.subr.mxu0 0.0
        %1099 = vmatpush1.msra.mxu0 %v1073
        %1100 = vmatprep.subr.mxu0 0.0
        %1101 = vmatpush1.msra.mxu0 %v1072
        %1102 = vmatprep.subr.mxu0 0.0
        %1103 = vmatpush1.msra.mxu0 %v1071
        %1104 = vmatprep.subr.mxu0 0.0
        %1105 = vmatpush1.msra.mxu0 %v1070
        %1106 = vmatprep.subr.mxu0 0.0
        %1107 = vmatpush2.msra.mxu0 0.0
        %1108 = vmatprep.subr.mxu0 0.0
        %1109 = vmatpush2.msra.mxu0 0.0
        %1110 = vmatprep.subr.mxu0 0.0
        %1111 = vmatpush2.msra.mxu0 0.0
        %1112 = vmatprep.subr.mxu0 0.0
        %1113 = vmatpush2.msra.mxu0 0.0
        %1114 = vmatprep.subr.mxu0 0.0
        %1115 = vmatpush2.msra.mxu0 0.0
        %1116 = vmatprep.subr.mxu0 0.0
        %1117 = vmatpush2.msra.mxu0 0.0
        %1118 = vmatprep.subr.mxu0 0.0
        %1119 = vmatpush2.msra.mxu0 0.0
        %1120 = vmatprep.subr.mxu0 0.0
        %1121 = vmatpush2.msra.mxu0 0.0
        %1122 = vmatprep.subr.mxu0 0.0
        %1123 = vmatpush2.msra.mxu0 0.0
        %1124 = vmatprep.subr.mxu0 0.0
        %1125 = vmatpush2.msra.mxu0 0.0
        %1126 = vmatprep.subr.mxu0 0.0
        %1127 = vmatpush2.msra.mxu0 0.0
        %1128 = vmatprep.subr.mxu0 0.0
        %1129 = vmatpush2.msra.mxu0 0.0
        %1130 = vmatprep.subr.mxu0 0.0
        %1131 = vmatpush2.msra.mxu0 0.0
        %1132 = vmatprep.subr.mxu0 0.0
        %1133 = vmatpush2.msra.mxu0 0.0
        %1134 = vmatprep.subr.mxu0 0.0
        %1135 = vmatpush2.msra.mxu0 0.0
        %1136 = vmatprep.subr.mxu0 0.0
        %1137 = vmatpush2.msra.mxu0 0.0
        %1138 = vmatprep.mubr.f32.mxu0 0.0
        %1139 = vmatmul.mubr.f32.gmra.mxu0 %v290
        %v1140 = vpop.f32.mrf.mxu0
        %v1141 = vadd.f32 0.0, %v1140
        %v1142 = vpop.f32.mrf.mxu0
        %1143 = vdwg.mxu0
        %s1144 = scalar_lea.vmem %s4, 64
        %v1145 = vld [vmem:[%s1144] sm:$0xff]
        %v1146 = vld [vmem:[%s1144 + $0x8] sm:$0xff]
        %v1147 = vld [vmem:[%s1144 + $0x10] sm:$0xff]
        %v1148 = vld [vmem:[%s1144 + $0x18] sm:$0xff]
        %1149 = vmatprep.subr.mxu0 0.0
        %1150 = vmatpush1.msra.mxu0 0.0
        %1151 = vmatprep.subr.mxu0 0.0
        %1152 = vmatpush1.msra.mxu0 0.0
        %1153 = vmatprep.subr.mxu0 0.0
        %1154 = vmatpush1.msra.mxu0 0.0
        %1155 = vmatprep.subr.mxu0 0.0
        %1156 = vmatpush1.msra.mxu0 0.0
        %1157 = vmatprep.subr.mxu0 0.0
        %1158 = vmatpush1.msra.mxu0 0.0
        %1159 = vmatprep.subr.mxu0 0.0
        %1160 = vmatpush1.msra.mxu0 0.0
        %1161 = vmatprep.subr.mxu0 0.0
        %1162 = vmatpush1.msra.mxu0 0.0
        %1163 = vmatprep.subr.mxu0 0.0
        %1164 = vmatpush1.msra.mxu0 0.0
        %1165 = vmatprep.subr.mxu0 0.0
        %1166 = vmatpush1.msra.mxu0 0.0
        %1167 = vmatprep.subr.mxu0 0.0
        %1168 = vmatpush1.msra.mxu0 0.0
        %1169 = vmatprep.subr.mxu0 0.0
        %1170 = vmatpush1.msra.mxu0 0.0
        %1171 = vmatprep.subr.mxu0 0.0
        %1172 = vmatpush1.msra.mxu0 0.0
        %1173 = vmatprep.subr.mxu0 0.0
        %1174 = vmatpush1.msra.mxu0 %v1148
        %1175 = vmatprep.subr.mxu0 0.0
        %1176 = vmatpush1.msra.mxu0 %v1147
        %1177 = vmatprep.subr.mxu0 0.0
        %1178 = vmatpush1.msra.mxu0 %v1146
        %1179 = vmatprep.subr.mxu0 0.0
        %1180 = vmatpush1.msra.mxu0 %v1145
        %1181 = vmatprep.subr.mxu0 0.0
        %1182 = vmatpush2.msra.mxu0 0.0
        %1183 = vmatprep.subr.mxu0 0.0
        %1184 = vmatpush2.msra.mxu0 0.0
        %1185 = vmatprep.subr.mxu0 0.0
        %1186 = vmatpush2.msra.mxu0 0.0
        %1187 = vmatprep.subr.mxu0 0.0
        %1188 = vmatpush2.msra.mxu0 0.0
        %1189 = vmatprep.subr.mxu0 0.0
        %1190 = vmatpush2.msra.mxu0 0.0
        %1191 = vmatprep.subr.mxu0 0.0
        %1192 = vmatpush2.msra.mxu0 0.0
        %1193 = vmatprep.subr.mxu0 0.0
        %1194 = vmatpush2.msra.mxu0 0.0
        %1195 = vmatprep.subr.mxu0 0.0
        %1196 = vmatpush2.msra.mxu0 0.0
        %1197 = vmatprep.subr.mxu0 0.0
        %1198 = vmatpush2.msra.mxu0 0.0
        %1199 = vmatprep.subr.mxu0 0.0
        %1200 = vmatpush2.msra.mxu0 0.0
        %1201 = vmatprep.subr.mxu0 0.0
        %1202 = vmatpush2.msra.mxu0 0.0
        %1203 = vmatprep.subr.mxu0 0.0
        %1204 = vmatpush2.msra.mxu0 0.0
        %1205 = vmatprep.subr.mxu0 0.0
        %1206 = vmatpush2.msra.mxu0 0.0
        %1207 = vmatprep.subr.mxu0 0.0
        %1208 = vmatpush2.msra.mxu0 0.0
        %1209 = vmatprep.subr.mxu0 0.0
        %1210 = vmatpush2.msra.mxu0 0.0
        %1211 = vmatprep.subr.mxu0 0.0
        %1212 = vmatpush2.msra.mxu0 0.0
        %1213 = vmatprep.mubr.f32.mxu0 0.0
        %1214 = vmatmul.mubr.f32.gmra.mxu0 %v367
        %v1215 = vpop.f32.mrf.mxu0
        %v1216 = vadd.f32 0.0, %v1215
        %v1217 = vpop.f32.mrf.mxu0
        %1218 = vdwg.mxu0
        %s1219 = scalar_lea.vmem %s5, 64
        %v1220 = vld [vmem:[%s1219] sm:$0xff]
        %v1221 = vld [vmem:[%s1219 + $0x8] sm:$0xff]
        %v1222 = vld [vmem:[%s1219 + $0x10] sm:$0xff]
        %v1223 = vld [vmem:[%s1219 + $0x18] sm:$0xff]
        %1224 = vmatprep.subr.mxu0 0.0
        %1225 = vmatpush1.msra.mxu0 0.0
        %1226 = vmatprep.subr.mxu0 0.0
        %1227 = vmatpush1.msra.mxu0 0.0
        %1228 = vmatprep.subr.mxu0 0.0
        %1229 = vmatpush1.msra.mxu0 0.0
        %1230 = vmatprep.subr.mxu0 0.0
        %1231 = vmatpush1.msra.mxu0 0.0
        %1232 = vmatprep.subr.mxu0 0.0
        %1233 = vmatpush1.msra.mxu0 0.0
        %1234 = vmatprep.subr.mxu0 0.0
        %1235 = vmatpush1.msra.mxu0 0.0
        %1236 = vmatprep.subr.mxu0 0.0
        %1237 = vmatpush1.msra.mxu0 0.0
        %1238 = vmatprep.subr.mxu0 0.0
        %1239 = vmatpush1.msra.mxu0 0.0
        %1240 = vmatprep.subr.mxu0 0.0
        %1241 = vmatpush1.msra.mxu0 0.0
        %1242 = vmatprep.subr.mxu0 0.0
        %1243 = vmatpush1.msra.mxu0 0.0
        %1244 = vmatprep.subr.mxu0 0.0
        %1245 = vmatpush1.msra.mxu0 0.0
        %1246 = vmatprep.subr.mxu0 0.0
        %1247 = vmatpush1.msra.mxu0 0.0
        %1248 = vmatprep.subr.mxu0 0.0
        %1249 = vmatpush1.msra.mxu0 %v1223
        %1250 = vmatprep.subr.mxu0 0.0
        %1251 = vmatpush1.msra.mxu0 %v1222
        %1252 = vmatprep.subr.mxu0 0.0
        %1253 = vmatpush1.msra.mxu0 %v1221
        %1254 = vmatprep.subr.mxu0 0.0
        %1255 = vmatpush1.msra.mxu0 %v1220
        %1256 = vmatprep.subr.mxu0 0.0
        %1257 = vmatpush2.msra.mxu0 0.0
        %1258 = vmatprep.subr.mxu0 0.0
        %1259 = vmatpush2.msra.mxu0 0.0
        %1260 = vmatprep.subr.mxu0 0.0
        %1261 = vmatpush2.msra.mxu0 0.0
        %1262 = vmatprep.subr.mxu0 0.0
        %1263 = vmatpush2.msra.mxu0 0.0
        %1264 = vmatprep.subr.mxu0 0.0
        %1265 = vmatpush2.msra.mxu0 0.0
        %1266 = vmatprep.subr.mxu0 0.0
        %1267 = vmatpush2.msra.mxu0 0.0
        %1268 = vmatprep.subr.mxu0 0.0
        %1269 = vmatpush2.msra.mxu0 0.0
        %1270 = vmatprep.subr.mxu0 0.0
        %1271 = vmatpush2.msra.mxu0 0.0
        %1272 = vmatprep.subr.mxu0 0.0
        %1273 = vmatpush2.msra.mxu0 0.0
        %1274 = vmatprep.subr.mxu0 0.0
        %1275 = vmatpush2.msra.mxu0 0.0
        %1276 = vmatprep.subr.mxu0 0.0
        %1277 = vmatpush2.msra.mxu0 0.0
        %1278 = vmatprep.subr.mxu0 0.0
        %1279 = vmatpush2.msra.mxu0 0.0
        %1280 = vmatprep.subr.mxu0 0.0
        %1281 = vmatpush2.msra.mxu0 0.0
        %1282 = vmatprep.subr.mxu0 0.0
        %1283 = vmatpush2.msra.mxu0 0.0
        %1284 = vmatprep.subr.mxu0 0.0
        %1285 = vmatpush2.msra.mxu0 0.0
        %1286 = vmatprep.subr.mxu0 0.0
        %1287 = vmatpush2.msra.mxu0 0.0
        %1288 = vmatprep.mubr.f32.mxu0 0.0
        %1289 = vmatmul.mubr.f32.gmra.mxu0 %v444
        %v1290 = vpop.f32.mrf.mxu0
        %v1291 = vadd.f32 0.0, %v1290
        %v1292 = vpop.f32.mrf.mxu0
        %1293 = vdwg.mxu0
        %v1295 = vsel %vm516, %v1141, 0
        %v1298 = vsel %vm516, %v1216, 0
        %1300 = vmatprep.subr.mxu0 0.0
        %1301 = vmatpush1.xpose.msra.mxu0 0.0
        %1302 = vmatprep.subr.mxu0 0.0
        %1303 = vmatpush1.xpose.msra.mxu0 0.0
        %1304 = vmatprep.subr.mxu0 0.0
        %1305 = vmatpush1.xpose.msra.mxu0 0.0
        %1306 = vmatprep.subr.mxu0 0.0
        %1307 = vmatpush1.xpose.msra.mxu0 0.0
        %1308 = vmatprep.subr.mxu0 0.0
        %1309 = vmatpush1.xpose.msra.mxu0 0.0
        %1310 = vmatprep.subr.mxu0 0.0
        %1311 = vmatpush1.xpose.msra.mxu0 0.0
        %1312 = vmatprep.subr.mxu0 0.0
        %1313 = vmatpush1.xpose.msra.mxu0 0.0
        %1314 = vmatprep.subr.mxu0 0.0
        %1315 = vmatpush1.xpose.msra.mxu0 0.0
        %1316 = vmatprep.subr.mxu0 0.0
        %1317 = vmatpush1.xpose.msra.mxu0 0.0
        %1318 = vmatprep.subr.mxu0 0.0
        %1319 = vmatpush1.xpose.msra.mxu0 0.0
        %1320 = vmatprep.subr.mxu0 0.0
        %1321 = vmatpush1.xpose.msra.mxu0 0.0
        %1322 = vmatprep.subr.mxu0 0.0
        %1323 = vmatpush1.xpose.msra.mxu0 0.0
        %1324 = vmatprep.subr.mxu0 0.0
        %1325 = vmatpush1.xpose.msra.mxu0 0.0
        %1326 = vmatprep.subr.mxu0 0.0
        %1327 = vmatpush1.xpose.msra.mxu0 0.0
        %1328 = vmatprep.subr.mxu0 0.0
        %1329 = vmatpush1.xpose.msra.mxu0 0.0
        %1330 = vmatprep.subr.mxu0 0.0
        %1331 = vmatpush1.xpose.msra.mxu0 %v1298
        %1332 = vmatprep.subr.mxu0 0.0
        %1333 = vmatpush2.xpose.msra.mxu0 0.0
        %1334 = vmatprep.subr.mxu0 0.0
        %1335 = vmatpush2.xpose.msra.mxu0 0.0
        %1336 = vmatprep.subr.mxu0 0.0
        %1337 = vmatpush2.xpose.msra.mxu0 0.0
        %1338 = vmatprep.subr.mxu0 0.0
        %1339 = vmatpush2.xpose.msra.mxu0 0.0
        %1340 = vmatprep.subr.mxu0 0.0
        %1341 = vmatpush2.xpose.msra.mxu0 0.0
        %1342 = vmatprep.subr.mxu0 0.0
        %1343 = vmatpush2.xpose.msra.mxu0 0.0
        %1344 = vmatprep.subr.mxu0 0.0
        %1345 = vmatpush2.xpose.msra.mxu0 0.0
        %1346 = vmatprep.subr.mxu0 0.0
        %1347 = vmatpush2.xpose.msra.mxu0 0.0
        %1348 = vmatprep.subr.mxu0 0.0
        %1349 = vmatpush2.xpose.msra.mxu0 0.0
        %1350 = vmatprep.subr.mxu0 0.0
        %1351 = vmatpush2.xpose.msra.mxu0 0.0
        %1352 = vmatprep.subr.mxu0 0.0
        %1353 = vmatpush2.xpose.msra.mxu0 0.0
        %1354 = vmatprep.subr.mxu0 0.0
        %1355 = vmatpush2.xpose.msra.mxu0 0.0
        %1356 = vmatprep.subr.mxu0 0.0
        %1357 = vmatpush2.xpose.msra.mxu0 0.0
        %1358 = vmatprep.subr.mxu0 0.0
        %1359 = vmatpush2.xpose.msra.mxu0 0.0
        %1360 = vmatprep.subr.mxu0 0.0
        %1361 = vmatpush2.xpose.msra.mxu0 0.0
        %1362 = vmatprep.subr.mxu0 0.0
        %1363 = vmatpush2.xpose.msra.mxu0 0.0
        %1364 = vmatprep.mubr.f32.mxu0 0.0
        %1365 = vmatmul.mubr.f32.gmra.mxu0 %v1295
        %v1366 = vpop.f32.mrf.mxu0
        %v1367 = vadd.f32 0.0, %v1366
        %v1368 = vpop.f32.mrf.mxu0
        %1369 = vdwg.mxu0
        %v1370 = vsel %vm516, %v1367, -inf
        %1371 = vmax.xlane.f32.xlu0 %v1370
        %v1372 = vpop.xlane.xlu0 %1371
        %v1373 = vsub.f32 %v1367, %v1372
        %v1374 = vmul.f32 %v1373, 1.442695
        %v1375 = vpow.pop %v1374
        %v1376 = vsel %vm516, %v1375, 0.0
        %1377 = vadd.xlane.f32.xlu0 %v1376
        %v1378 = vpop.xlane.xlu0 %1377
        %v1379 = vrcp.pop %v1378
        %v1380 = vmul.f32 %v1375, %v1379
        %v1382 = vsel %vm516, %v1380, 0
        %1384 = vmatprep.subr.mxu0 0.0
        %1385 = vmatpush1.msra.mxu0 0.0
        %1386 = vmatprep.subr.mxu0 0.0
        %1387 = vmatpush1.msra.mxu0 0.0
        %1388 = vmatprep.subr.mxu0 0.0
        %1389 = vmatpush1.msra.mxu0 0.0
        %1390 = vmatprep.subr.mxu0 0.0
        %1391 = vmatpush1.msra.mxu0 0.0
        %1392 = vmatprep.subr.mxu0 0.0
        %1393 = vmatpush1.msra.mxu0 0.0
        %1394 = vmatprep.subr.mxu0 0.0
        %1395 = vmatpush1.msra.mxu0 0.0
        %1396 = vmatprep.subr.mxu0 0.0
        %1397 = vmatpush1.msra.mxu0 0.0
        %1398 = vmatprep.subr.mxu0 0.0
        %1399 = vmatpush1.msra.mxu0 0.0
        %1400 = vmatprep.subr.mxu0 0.0
        %1401 = vmatpush1.msra.mxu0 0.0
        %1402 = vmatprep.subr.mxu0 0.0
        %1403 = vmatpush1.msra.mxu0 0.0
        %1404 = vmatprep.subr.mxu0 0.0
        %1405 = vmatpush1.msra.mxu0 0.0
        %1406 = vmatprep.subr.mxu0 0.0
        %1407 = vmatpush1.msra.mxu0 0.0
        %1408 = vmatprep.subr.mxu0 0.0
        %1409 = vmatpush1.msra.mxu0 0.0
        %1410 = vmatprep.subr.mxu0 0.0
        %1411 = vmatpush1.msra.mxu0 0.0
        %1412 = vmatprep.subr.mxu0 0.0
        %1413 = vmatpush1.msra.mxu0 0.0
        %1414 = vmatprep.subr.mxu0 0.0
        %1415 = vmatpush1.msra.mxu0 %v1291
        %1416 = vmatprep.subr.mxu0 0.0
        %1417 = vmatpush2.msra.mxu0 0.0
        %1418 = vmatprep.subr.mxu0 0.0
        %1419 = vmatpush2.msra.mxu0 0.0
        %1420 = vmatprep.subr.mxu0 0.0
        %1421 = vmatpush2.msra.mxu0 0.0
        %1422 = vmatprep.subr.mxu0 0.0
        %1423 = vmatpush2.msra.mxu0 0.0
        %1424 = vmatprep.subr.mxu0 0.0
        %1425 = vmatpush2.msra.mxu0 0.0
        %1426 = vmatprep.subr.mxu0 0.0
        %1427 = vmatpush2.msra.mxu0 0.0
        %1428 = vmatprep.subr.mxu0 0.0
        %1429 = vmatpush2.msra.mxu0 0.0
        %1430 = vmatprep.subr.mxu0 0.0
        %1431 = vmatpush2.msra.mxu0 0.0
        %1432 = vmatprep.subr.mxu0 0.0
        %1433 = vmatpush2.msra.mxu0 0.0
        %1434 = vmatprep.subr.mxu0 0.0
        %1435 = vmatpush2.msra.mxu0 0.0
        %1436 = vmatprep.subr.mxu0 0.0
        %1437 = vmatpush2.msra.mxu0 0.0
        %1438 = vmatprep.subr.mxu0 0.0
        %1439 = vmatpush2.msra.mxu0 0.0
        %1440 = vmatprep.subr.mxu0 0.0
        %1441 = vmatpush2.msra.mxu0 0.0
        %1442 = vmatprep.subr.mxu0 0.0
        %1443 = vmatpush2.msra.mxu0 0.0
        %1444 = vmatprep.subr.mxu0 0.0
        %1445 = vmatpush2.msra.mxu0 0.0
        %1446 = vmatprep.subr.mxu0 0.0
        %1447 = vmatpush2.msra.mxu0 0.0
        %1448 = vmatprep.mubr.f32.mxu0 0.0
        %1449 = vmatmul.mubr.f32.gmra.mxu0 %v1382
        %v1450 = vpop.f32.mrf.mxu0
        %v1451 = vadd.f32 0.0, %v1450
        %v1452 = vpop.f32.mrf.mxu0
        %1453 = vdwg.mxu0
        %1455 = vrot.lane.b32.xlu0 %v1451, 16
        %v1456 = vpop.permute.xlu0 %1455
        %vm1458 = vcmask 195712
        %1459 = vst.msk [vmem:[#allocation2] sm:$0xff] %vm1458, %v1456
        %s1460 = scalar_lea.vmem %s3, 96
        %v1461 = vld [vmem:[%s1460] sm:$0xff]
        %v1462 = vld [vmem:[%s1460 + $0x8] sm:$0xff]
        %v1463 = vld [vmem:[%s1460 + $0x10] sm:$0xff]
        %v1464 = vld [vmem:[%s1460 + $0x18] sm:$0xff]
        %1465 = vmatprep.subr.mxu0 0.0
        %1466 = vmatpush1.msra.mxu0 0.0
        %1467 = vmatprep.subr.mxu0 0.0
        %1468 = vmatpush1.msra.mxu0 0.0
        %1469 = vmatprep.subr.mxu0 0.0
        %1470 = vmatpush1.msra.mxu0 0.0
        %1471 = vmatprep.subr.mxu0 0.0
        %1472 = vmatpush1.msra.mxu0 0.0
        %1473 = vmatprep.subr.mxu0 0.0
        %1474 = vmatpush1.msra.mxu0 0.0
        %1475 = vmatprep.subr.mxu0 0.0
        %1476 = vmatpush1.msra.mxu0 0.0
        %1477 = vmatprep.subr.mxu0 0.0
        %1478 = vmatpush1.msra.mxu0 0.0
        %1479 = vmatprep.subr.mxu0 0.0
        %1480 = vmatpush1.msra.mxu0 0.0
        %1481 = vmatprep.subr.mxu0 0.0
        %1482 = vmatpush1.msra.mxu0 0.0
        %1483 = vmatprep.subr.mxu0 0.0
        %1484 = vmatpush1.msra.mxu0 0.0
        %1485 = vmatprep.subr.mxu0 0.0
        %1486 = vmatpush1.msra.mxu0 0.0
        %1487 = vmatprep.subr.mxu0 0.0
        %1488 = vmatpush1.msra.mxu0 0.0
        %1489 = vmatprep.subr.mxu0 0.0
        %1490 = vmatpush1.msra.mxu0 %v1464
        %1491 = vmatprep.subr.mxu0 0.0
        %1492 = vmatpush1.msra.mxu0 %v1463
        %1493 = vmatprep.subr.mxu0 0.0
        %1494 = vmatpush1.msra.mxu0 %v1462
        %1495 = vmatprep.subr.mxu0 0.0
        %1496 = vmatpush1.msra.mxu0 %v1461
        %1497 = vmatprep.subr.mxu0 0.0
        %1498 = vmatpush2.msra.mxu0 0.0
        %1499 = vmatprep.subr.mxu0 0.0
        %1500 = vmatpush2.msra.mxu0 0.0
        %1501 = vmatprep.subr.mxu0 0.0
        %1502 = vmatpush2.msra.mxu0 0.0
        %1503 = vmatprep.subr.mxu0 0.0
        %1504 = vmatpush2.msra.mxu0 0.0
        %1505 = vmatprep.subr.mxu0 0.0
        %1506 = vmatpush2.msra.mxu0 0.0
        %1507 = vmatprep.subr.mxu0 0.0
        %1508 = vmatpush2.msra.mxu0 0.0
        %1509 = vmatprep.subr.mxu0 0.0
        %1510 = vmatpush2.msra.mxu0 0.0
        %1511 = vmatprep.subr.mxu0 0.0
        %1512 = vmatpush2.msra.mxu0 0.0
        %1513 = vmatprep.subr.mxu0 0.0
        %1514 = vmatpush2.msra.mxu0 0.0
        %1515 = vmatprep.subr.mxu0 0.0
        %1516 = vmatpush2.msra.mxu0 0.0
        %1517 = vmatprep.subr.mxu0 0.0
        %1518 = vmatpush2.msra.mxu0 0.0
        %1519 = vmatprep.subr.mxu0 0.0
        %1520 = vmatpush2.msra.mxu0 0.0
        %1521 = vmatprep.subr.mxu0 0.0
        %1522 = vmatpush2.msra.mxu0 0.0
        %1523 = vmatprep.subr.mxu0 0.0
        %1524 = vmatpush2.msra.mxu0 0.0
        %1525 = vmatprep.subr.mxu0 0.0
        %1526 = vmatpush2.msra.mxu0 0.0
        %1527 = vmatprep.subr.mxu0 0.0
        %1528 = vmatpush2.msra.mxu0 0.0
        %1529 = vmatprep.mubr.f32.mxu0 0.0
        %1530 = vmatmul.mubr.f32.gmra.mxu0 %v290
        %v1531 = vpop.f32.mrf.mxu0
        %v1532 = vadd.f32 0.0, %v1531
        %v1533 = vpop.f32.mrf.mxu0
        %1534 = vdwg.mxu0
        %s1535 = scalar_lea.vmem %s4, 96
        %v1536 = vld [vmem:[%s1535] sm:$0xff]
        %v1537 = vld [vmem:[%s1535 + $0x8] sm:$0xff]
        %v1538 = vld [vmem:[%s1535 + $0x10] sm:$0xff]
        %v1539 = vld [vmem:[%s1535 + $0x18] sm:$0xff]
        %1540 = vmatprep.subr.mxu0 0.0
        %1541 = vmatpush1.msra.mxu0 0.0
        %1542 = vmatprep.subr.mxu0 0.0
        %1543 = vmatpush1.msra.mxu0 0.0
        %1544 = vmatprep.subr.mxu0 0.0
        %1545 = vmatpush1.msra.mxu0 0.0
        %1546 = vmatprep.subr.mxu0 0.0
        %1547 = vmatpush1.msra.mxu0 0.0
        %1548 = vmatprep.subr.mxu0 0.0
        %1549 = vmatpush1.msra.mxu0 0.0
        %1550 = vmatprep.subr.mxu0 0.0
        %1551 = vmatpush1.msra.mxu0 0.0
        %1552 = vmatprep.subr.mxu0 0.0
        %1553 = vmatpush1.msra.mxu0 0.0
        %1554 = vmatprep.subr.mxu0 0.0
        %1555 = vmatpush1.msra.mxu0 0.0
        %1556 = vmatprep.subr.mxu0 0.0
        %1557 = vmatpush1.msra.mxu0 0.0
        %1558 = vmatprep.subr.mxu0 0.0
        %1559 = vmatpush1.msra.mxu0 0.0
        %1560 = vmatprep.subr.mxu0 0.0
        %1561 = vmatpush1.msra.mxu0 0.0
        %1562 = vmatprep.subr.mxu0 0.0
        %1563 = vmatpush1.msra.mxu0 0.0
        %1564 = vmatprep.subr.mxu0 0.0
        %1565 = vmatpush1.msra.mxu0 %v1539
        %1566 = vmatprep.subr.mxu0 0.0
        %1567 = vmatpush1.msra.mxu0 %v1538
        %1568 = vmatprep.subr.mxu0 0.0
        %1569 = vmatpush1.msra.mxu0 %v1537
        %1570 = vmatprep.subr.mxu0 0.0
        %1571 = vmatpush1.msra.mxu0 %v1536
        %1572 = vmatprep.subr.mxu0 0.0
        %1573 = vmatpush2.msra.mxu0 0.0
        %1574 = vmatprep.subr.mxu0 0.0
        %1575 = vmatpush2.msra.mxu0 0.0
        %1576 = vmatprep.subr.mxu0 0.0
        %1577 = vmatpush2.msra.mxu0 0.0
        %1578 = vmatprep.subr.mxu0 0.0
        %1579 = vmatpush2.msra.mxu0 0.0
        %1580 = vmatprep.subr.mxu0 0.0
        %1581 = vmatpush2.msra.mxu0 0.0
        %1582 = vmatprep.subr.mxu0 0.0
        %1583 = vmatpush2.msra.mxu0 0.0
        %1584 = vmatprep.subr.mxu0 0.0
        %1585 = vmatpush2.msra.mxu0 0.0
        %1586 = vmatprep.subr.mxu0 0.0
        %1587 = vmatpush2.msra.mxu0 0.0
        %1588 = vmatprep.subr.mxu0 0.0
        %1589 = vmatpush2.msra.mxu0 0.0
        %1590 = vmatprep.subr.mxu0 0.0
        %1591 = vmatpush2.msra.mxu0 0.0
        %1592 = vmatprep.subr.mxu0 0.0
        %1593 = vmatpush2.msra.mxu0 0.0
        %1594 = vmatprep.subr.mxu0 0.0
        %1595 = vmatpush2.msra.mxu0 0.0
        %1596 = vmatprep.subr.mxu0 0.0
        %1597 = vmatpush2.msra.mxu0 0.0
        %1598 = vmatprep.subr.mxu0 0.0
        %1599 = vmatpush2.msra.mxu0 0.0
        %1600 = vmatprep.subr.mxu0 0.0
        %1601 = vmatpush2.msra.mxu0 0.0
        %1602 = vmatprep.subr.mxu0 0.0
        %1603 = vmatpush2.msra.mxu0 0.0
        %1604 = vmatprep.mubr.f32.mxu0 0.0
        %1605 = vmatmul.mubr.f32.gmra.mxu0 %v367
        %v1606 = vpop.f32.mrf.mxu0
        %v1607 = vadd.f32 0.0, %v1606
        %v1608 = vpop.f32.mrf.mxu0
        %1609 = vdwg.mxu0
        %s1610 = scalar_lea.vmem %s5, 96
        %v1611 = vld [vmem:[%s1610] sm:$0xff]
        %v1612 = vld [vmem:[%s1610 + $0x8] sm:$0xff]
        %v1613 = vld [vmem:[%s1610 + $0x10] sm:$0xff]
        %v1614 = vld [vmem:[%s1610 + $0x18] sm:$0xff]
        %1615 = vmatprep.subr.mxu0 0.0
        %1616 = vmatpush1.msra.mxu0 0.0
        %1617 = vmatprep.subr.mxu0 0.0
        %1618 = vmatpush1.msra.mxu0 0.0
        %1619 = vmatprep.subr.mxu0 0.0
        %1620 = vmatpush1.msra.mxu0 0.0
        %1621 = vmatprep.subr.mxu0 0.0
        %1622 = vmatpush1.msra.mxu0 0.0
        %1623 = vmatprep.subr.mxu0 0.0
        %1624 = vmatpush1.msra.mxu0 0.0
        %1625 = vmatprep.subr.mxu0 0.0
        %1626 = vmatpush1.msra.mxu0 0.0
        %1627 = vmatprep.subr.mxu0 0.0
        %1628 = vmatpush1.msra.mxu0 0.0
        %1629 = vmatprep.subr.mxu0 0.0
        %1630 = vmatpush1.msra.mxu0 0.0
        %1631 = vmatprep.subr.mxu0 0.0
        %1632 = vmatpush1.msra.mxu0 0.0
        %1633 = vmatprep.subr.mxu0 0.0
        %1634 = vmatpush1.msra.mxu0 0.0
        %1635 = vmatprep.subr.mxu0 0.0
        %1636 = vmatpush1.msra.mxu0 0.0
        %1637 = vmatprep.subr.mxu0 0.0
        %1638 = vmatpush1.msra.mxu0 0.0
        %1639 = vmatprep.subr.mxu0 0.0
        %1640 = vmatpush1.msra.mxu0 %v1614
        %1641 = vmatprep.subr.mxu0 0.0
        %1642 = vmatpush1.msra.mxu0 %v1613
        %1643 = vmatprep.subr.mxu0 0.0
        %1644 = vmatpush1.msra.mxu0 %v1612
        %1645 = vmatprep.subr.mxu0 0.0
        %1646 = vmatpush1.msra.mxu0 %v1611
        %1647 = vmatprep.subr.mxu0 0.0
        %1648 = vmatpush2.msra.mxu0 0.0
        %1649 = vmatprep.subr.mxu0 0.0
        %1650 = vmatpush2.msra.mxu0 0.0
        %1651 = vmatprep.subr.mxu0 0.0
        %1652 = vmatpush2.msra.mxu0 0.0
        %1653 = vmatprep.subr.mxu0 0.0
        %1654 = vmatpush2.msra.mxu0 0.0
        %1655 = vmatprep.subr.mxu0 0.0
        %1656 = vmatpush2.msra.mxu0 0.0
        %1657 = vmatprep.subr.mxu0 0.0
        %1658 = vmatpush2.msra.mxu0 0.0
        %1659 = vmatprep.subr.mxu0 0.0
        %1660 = vmatpush2.msra.mxu0 0.0
        %1661 = vmatprep.subr.mxu0 0.0
        %1662 = vmatpush2.msra.mxu0 0.0
        %1663 = vmatprep.subr.mxu0 0.0
        %1664 = vmatpush2.msra.mxu0 0.0
        %1665 = vmatprep.subr.mxu0 0.0
        %1666 = vmatpush2.msra.mxu0 0.0
        %1667 = vmatprep.subr.mxu0 0.0
        %1668 = vmatpush2.msra.mxu0 0.0
        %1669 = vmatprep.subr.mxu0 0.0
        %1670 = vmatpush2.msra.mxu0 0.0
        %1671 = vmatprep.subr.mxu0 0.0
        %1672 = vmatpush2.msra.mxu0 0.0
        %1673 = vmatprep.subr.mxu0 0.0
        %1674 = vmatpush2.msra.mxu0 0.0
        %1675 = vmatprep.subr.mxu0 0.0
        %1676 = vmatpush2.msra.mxu0 0.0
        %1677 = vmatprep.subr.mxu0 0.0
        %1678 = vmatpush2.msra.mxu0 0.0
        %1679 = vmatprep.mubr.f32.mxu0 0.0
        %1680 = vmatmul.mubr.f32.gmra.mxu0 %v444
        %v1681 = vpop.f32.mrf.mxu0
        %v1682 = vadd.f32 0.0, %v1681
        %v1683 = vpop.f32.mrf.mxu0
        %1684 = vdwg.mxu0
        %v1686 = vsel %vm516, %v1532, 0
        %v1689 = vsel %vm516, %v1607, 0
        %1691 = vmatprep.subr.mxu0 0.0
        %1692 = vmatpush1.xpose.msra.mxu0 0.0
        %1693 = vmatprep.subr.mxu0 0.0
        %1694 = vmatpush1.xpose.msra.mxu0 0.0
        %1695 = vmatprep.subr.mxu0 0.0
        %1696 = vmatpush1.xpose.msra.mxu0 0.0
        %1697 = vmatprep.subr.mxu0 0.0
        %1698 = vmatpush1.xpose.msra.mxu0 0.0
        %1699 = vmatprep.subr.mxu0 0.0
        %1700 = vmatpush1.xpose.msra.mxu0 0.0
        %1701 = vmatprep.subr.mxu0 0.0
        %1702 = vmatpush1.xpose.msra.mxu0 0.0
        %1703 = vmatprep.subr.mxu0 0.0
        %1704 = vmatpush1.xpose.msra.mxu0 0.0
        %1705 = vmatprep.subr.mxu0 0.0
        %1706 = vmatpush1.xpose.msra.mxu0 0.0
        %1707 = vmatprep.subr.mxu0 0.0
        %1708 = vmatpush1.xpose.msra.mxu0 0.0
        %1709 = vmatprep.subr.mxu0 0.0
        %1710 = vmatpush1.xpose.msra.mxu0 0.0
        %1711 = vmatprep.subr.mxu0 0.0
        %1712 = vmatpush1.xpose.msra.mxu0 0.0
        %1713 = vmatprep.subr.mxu0 0.0
        %1714 = vmatpush1.xpose.msra.mxu0 0.0
        %1715 = vmatprep.subr.mxu0 0.0
        %1716 = vmatpush1.xpose.msra.mxu0 0.0
        %1717 = vmatprep.subr.mxu0 0.0
        %1718 = vmatpush1.xpose.msra.mxu0 0.0
        %1719 = vmatprep.subr.mxu0 0.0
        %1720 = vmatpush1.xpose.msra.mxu0 0.0
        %1721 = vmatprep.subr.mxu0 0.0
        %1722 = vmatpush1.xpose.msra.mxu0 %v1689
        %1723 = vmatprep.subr.mxu0 0.0
        %1724 = vmatpush2.xpose.msra.mxu0 0.0
        %1725 = vmatprep.subr.mxu0 0.0
        %1726 = vmatpush2.xpose.msra.mxu0 0.0
        %1727 = vmatprep.subr.mxu0 0.0
        %1728 = vmatpush2.xpose.msra.mxu0 0.0
        %1729 = vmatprep.subr.mxu0 0.0
        %1730 = vmatpush2.xpose.msra.mxu0 0.0
        %1731 = vmatprep.subr.mxu0 0.0
        %1732 = vmatpush2.xpose.msra.mxu0 0.0
        %1733 = vmatprep.subr.mxu0 0.0
        %1734 = vmatpush2.xpose.msra.mxu0 0.0
        %1735 = vmatprep.subr.mxu0 0.0
        %1736 = vmatpush2.xpose.msra.mxu0 0.0
        %1737 = vmatprep.subr.mxu0 0.0
        %1738 = vmatpush2.xpose.msra.mxu0 0.0
        %1739 = vmatprep.subr.mxu0 0.0
        %1740 = vmatpush2.xpose.msra.mxu0 0.0
        %1741 = vmatprep.subr.mxu0 0.0
        %1742 = vmatpush2.xpose.msra.mxu0 0.0
        %1743 = vmatprep.subr.mxu0 0.0
        %1744 = vmatpush2.xpose.msra.mxu0 0.0
        %1745 = vmatprep.subr.mxu0 0.0
        %1746 = vmatpush2.xpose.msra.mxu0 0.0
        %1747 = vmatprep.subr.mxu0 0.0
        %1748 = vmatpush2.xpose.msra.mxu0 0.0
        %1749 = vmatprep.subr.mxu0 0.0
        %1750 = vmatpush2.xpose.msra.mxu0 0.0
        %1751 = vmatprep.subr.mxu0 0.0
        %1752 = vmatpush2.xpose.msra.mxu0 0.0
        %1753 = vmatprep.subr.mxu0 0.0
        %1754 = vmatpush2.xpose.msra.mxu0 0.0
        %1755 = vmatprep.mubr.f32.mxu0 0.0
        %1756 = vmatmul.mubr.f32.gmra.mxu0 %v1686
        %v1757 = vpop.f32.mrf.mxu0
        %v1758 = vadd.f32 0.0, %v1757
        %v1759 = vpop.f32.mrf.mxu0
        %1760 = vdwg.mxu0
        %v1761 = vsel %vm516, %v1758, -inf
        %1762 = vmax.xlane.f32.xlu0 %v1761
        %v1763 = vpop.xlane.xlu0 %1762
        %v1764 = vsub.f32 %v1758, %v1763
        %v1765 = vmul.f32 %v1764, 1.442695
        %v1766 = vpow.pop %v1765
        %v1767 = vsel %vm516, %v1766, 0.0
        %1768 = vadd.xlane.f32.xlu0 %v1767
        %v1769 = vpop.xlane.xlu0 %1768
        %v1770 = vrcp.pop %v1769
        %v1771 = vmul.f32 %v1766, %v1770
        %v1773 = vsel %vm516, %v1771, 0
        %1775 = vmatprep.subr.mxu0 0.0
        %1776 = vmatpush1.msra.mxu0 0.0
        %1777 = vmatprep.subr.mxu0 0.0
        %1778 = vmatpush1.msra.mxu0 0.0
        %1779 = vmatprep.subr.mxu0 0.0
        %1780 = vmatpush1.msra.mxu0 0.0
        %1781 = vmatprep.subr.mxu0 0.0
        %1782 = vmatpush1.msra.mxu0 0.0
        %1783 = vmatprep.subr.mxu0 0.0
        %1784 = vmatpush1.msra.mxu0 0.0
        %1785 = vmatprep.subr.mxu0 0.0
        %1786 = vmatpush1.msra.mxu0 0.0
        %1787 = vmatprep.subr.mxu0 0.0
        %1788 = vmatpush1.msra.mxu0 0.0
        %1789 = vmatprep.subr.mxu0 0.0
        %1790 = vmatpush1.msra.mxu0 0.0
        %1791 = vmatprep.subr.mxu0 0.0
        %1792 = vmatpush1.msra.mxu0 0.0
        %1793 = vmatprep.subr.mxu0 0.0
        %1794 = vmatpush1.msra.mxu0 0.0
        %1795 = vmatprep.subr.mxu0 0.0
        %1796 = vmatpush1.msra.mxu0 0.0
        %1797 = vmatprep.subr.mxu0 0.0
        %1798 = vmatpush1.msra.mxu0 0.0
        %1799 = vmatprep.subr.mxu0 0.0
        %1800 = vmatpush1.msra.mxu0 0.0
        %1801 = vmatprep.subr.mxu0 0.0
        %1802 = vmatpush1.msra.mxu0 0.0
        %1803 = vmatprep.subr.mxu0 0.0
        %1804 = vmatpush1.msra.mxu0 0.0
        %1805 = vmatprep.subr.mxu0 0.0
        %1806 = vmatpush1.msra.mxu0 %v1682
        %1807 = vmatprep.subr.mxu0 0.0
        %1808 = vmatpush2.msra.mxu0 0.0
        %1809 = vmatprep.subr.mxu0 0.0
        %1810 = vmatpush2.msra.mxu0 0.0
        %1811 = vmatprep.subr.mxu0 0.0
        %1812 = vmatpush2.msra.mxu0 0.0
        %1813 = vmatprep.subr.mxu0 0.0
        %1814 = vmatpush2.msra.mxu0 0.0
        %1815 = vmatprep.subr.mxu0 0.0
        %1816 = vmatpush2.msra.mxu0 0.0
        %1817 = vmatprep.subr.mxu0 0.0
        %1818 = vmatpush2.msra.mxu0 0.0
        %1819 = vmatprep.subr.mxu0 0.0
        %1820 = vmatpush2.msra.mxu0 0.0
        %1821 = vmatprep.subr.mxu0 0.0
        %1822 = vmatpush2.msra.mxu0 0.0
        %1823 = vmatprep.subr.mxu0 0.0
        %1824 = vmatpush2.msra.mxu0 0.0
        %1825 = vmatprep.subr.mxu0 0.0
        %1826 = vmatpush2.msra.mxu0 0.0
        %1827 = vmatprep.subr.mxu0 0.0
        %1828 = vmatpush2.msra.mxu0 0.0
        %1829 = vmatprep.subr.mxu0 0.0
        %1830 = vmatpush2.msra.mxu0 0.0
        %1831 = vmatprep.subr.mxu0 0.0
        %1832 = vmatpush2.msra.mxu0 0.0
        %1833 = vmatprep.subr.mxu0 0.0
        %1834 = vmatpush2.msra.mxu0 0.0
        %1835 = vmatprep.subr.mxu0 0.0
        %1836 = vmatpush2.msra.mxu0 0.0
        %1837 = vmatprep.subr.mxu0 0.0
        %1838 = vmatpush2.msra.mxu0 0.0
        %1839 = vmatprep.mubr.f32.mxu0 0.0
        %1840 = vmatmul.mubr.f32.gmra.mxu0 %v1773
        %v1841 = vpop.f32.mrf.mxu0
        %v1842 = vadd.f32 0.0, %v1841
        %v1843 = vpop.f32.mrf.mxu0
        %1844 = vdwg.mxu0
        %1846 = vrot.lane.b32.xlu0 %v1842, 24
        %v1847 = vpop.permute.xlu0 %1846
        %vm1849 = vcmask 261312
        %1850 = vst.msk [vmem:[#allocation2] sm:$0xff] %vm1849, %v1847
        %v1851 = vld [vmem:[#allocation2] sm:$0xff]
        %1852 = vst.msk [vmem:[%s268] sm:$0xff] %vm288, %v1851
        %s1853 = sand.u32 %s169, 1
        %s1854 = scalar_lea.sflag [#allocation4], %s1853
        %s1855 = sand.u32 %s169, 1
        %s1856 = smul.addr %s1855, 8
        %s1857 = scalar_lea.vmem [#allocation3], %s1856
        // Predicated region
        $region45: #{tpu_custom_call.1} parent=43 // pred_check
          %p1858 = pneg %p179
        $region46: #{tpu_custom_call.1} parent=43 // pred_check_branch
          %1860 = sbr.rel (%p1858) target = $region48
        $region47: #{tpu_custom_call.1} parent=43 // pred_region
          %s1862 = ssub.s32 128, 128
          %1863 = vsyncadd %s1854, %s1862
          %s1864 = smul.addr %s20, 128
          %s1865 = scalar_lea.hbm %s6, %s1864
          %s1867 = sshll.u32 %s1857, 4
          %s1868 = int_to_ptr.vmem [resolvable:$true] %s1867
          %1870 = dma.vmem_to_hbm [thread:$0]  %s1868, 128, %s1865, %s1854
        $region48: #{tpu_custom_call.1} parent=43 // pred_fallthru
          _
      $region44: #{tpu_custom_call.1} parent=5 // pred_fallthru
        _
      %p1871 = scmp.le.s32.totalorder 2, %s15
      // Predicated region
      $region49: #{tpu_custom_call.1} parent=5 // pred_check
        %p1872 = pneg %p1871
      $region50: #{tpu_custom_call.1} parent=5 // pred_check_branch
        %1874 = sbr.rel (%p1872) target = $region52
      $region51: #{tpu_custom_call.1} parent=5 // pred_region
        %s1875 = ssub.s32 %s15, 2
        // Predicated region
        $region53: #{tpu_custom_call.1} parent=51 // pred_check
          %p1876 = pneg %p185
        $region54: #{tpu_custom_call.1} parent=51 // pred_check_branch
          %1878 = sbr.rel (%p1876) target = $region56
        $region55: #{tpu_custom_call.1} parent=51 // pred_region
          %s1879 = sand.u32 %s170, 1
          %s1880 = scalar_lea.sflag [#allocation4], %s1879
          %s1881 = sand.u32 %s170, 1
          %s1882 = smul.addr %s1881, 8
          %s1883 = scalar_lea.vmem [#allocation3], %s1882
          %1884 = dma.done %s1880, 128
        $region56: #{tpu_custom_call.1} parent=51 // pred_fallthru
          _
      $region52: #{tpu_custom_call.1} parent=5 // pred_fallthru
        _
    $region6: #{tpu_custom_call.1} parent=1 // loop_footer
      %s19 = sadd.s32 1, %s15
    $region7: #{tpu_custom_call.1} parent=1 // loop_footer_branch
      %14 = sbr.rel target = $region3
    $region8: #{tpu_custom_call.1} parent=1 // loop_exit
      _
    %1885 = vsyncpa [#allocation4], 1
    %s1886 = scalar_lea.sflag [#allocation4], 1
    %1887 = vsyncpa %s1886, 1

</llo_original>
